<compile_context>
chip_gen: v7x
topology: tpu7x:2x2x1
jax: 0.10.0
libtpu: 0.0.40
codegen_flags: <defaults>
</compile_context>

<pallas_src>
import math

import jax
import jax.numpy as jnp
import numpy as np
from jax.experimental import pallas as pl
from jax.experimental.pallas import tpu as pltpu

# ---------------- problem configuration (mirrors the PyTorch module) ----------------
OBS_DIM = (4, 16, 16)          # (C, H, W) -- PyTorch NCHW convention
ACT_DIM = 4
HIDDEN_SIZES = (32, 32)
CNN_OUT = 18                   # cnn_output_size
LOG_STD_MIN = -20.0
LOG_STD_MAX = 2.0
BATCH = 2

C_IN, H_IN, W_IN = OBS_DIM
HH, WW = H_IN // 2, W_IN // 2          # pooled spatial dims (8, 8)
FLAT = CNN_OUT * HH * WW               # 1152
H0, H1 = HIDDEN_SIZES                  # 32, 32
KW = (W_IN + 2) * C_IN                 # 72  : conv LHS lanes = (w_padded, c_in)
WWC = WW * CNN_OUT                     # 144 : pooled lanes   = (ww, c_out)
HEAD_W = 2 * ACT_DIM                   # merged mu | log_sigma head width
OUT_W = 16                             # output slab: [pi(4) | mu(4) | logp(1) | 0...]
_LOG_SQRT_2PI = math.log(math.sqrt(2.0 * math.pi))


# =====================================================================================
# Fused forward: one pallas_call, no grid, whole-array VMEM operands
# =====================================================================================
def actor_forward(obs_nchw, params, eps):
    B = obs_nchw.shape[0]
    NPB = 9 * B                          # rows per h-parity block in the reordered input
    ROWS = HH * B                        # rows of one conv-LHS window / pooled buffer

    def kernel(x_ref, wcomb_ref, w1seg_ref, wtail_ref, bias_ref, eps_ref,
               out_ref, pooled_ref):
        # ---------------- conv3x3(pad=1) + ReLU + maxpool(2x2) ----------------
        # x_ref rows: (h_parity, h_half_index, batch); lanes: (w_padded, c_in).
        # For pool h-offset r and tap dy the needed padded rows are a CONTIGUOUS
        # 16-row window starting at parity*(9B) + ((r+dy)//2)*B, ordered (hh, b).
        xwin = []
        for t in range(4):                              # t = r + dy in 0..3
            p, q = t % 2, t // 2
            start = p * NPB + q * B
            xwin.append(x_ref[start:start + ROWS, :])   # (HH*B, 72)

        # 12 accumulating matmuls: one (16,72)@(72,144) per (dy, pool w-offset s,
        # pool h-offset r).  Each (r,s) keeps its own small accumulator.
        accs = [[None, None], [None, None]]
        for dy in range(3):
            for s in range(2):
                w_tap = wcomb_ref[dy * 2 + s]           # (72, 144) block-diag tap weight
                for r in range(2):
                    contrib = jnp.dot(xwin[r + dy], w_tap,
                                      preferred_element_type=jnp.float32)
                    accs[r][s] = contrib if accs[r][s] is None else accs[r][s] + contrib

        # bias + relu hoisted AFTER the 4-way pool max (bias is pool-invariant,
        # relu∘max == max∘relu) -> work on (16,144) instead of 4x that.
        pooled = jnp.maximum(jnp.maximum(accs[0][0], accs[0][1]),
                             jnp.maximum(accs[1][0], accs[1][1]))
        pooled = jnp.maximum(pooled + bias_ref[:, 0:WWC], 0.0)   # (HH*B, 144)
        pooled_ref[...] = pooled                                  # rows=(hh,b), lanes=(ww,c)

        # ---------------- MLP layer 1 as per-hh segment matmuls ----------------
        # h0 = sum_hh pooled[hh-block] @ W1seg[hh]  (PyTorch flatten folded into
        # W1seg at init) -> no in-kernel flatten / transpose needed.
        h = None
        for hh in range(HH):
            seg = jnp.dot(pooled_ref[hh * B:(hh + 1) * B, :], w1seg_ref[hh],
                          preferred_element_type=jnp.float32)
            h = seg if h is None else h + seg
        h = jnp.maximum(h + bias_ref[:, WWC:WWC + H0], 0.0)                     # (B, H0)

        # layer 2 + merged mu|log_sigma head (w2 and whead packed in one slab;
        # valid because H0 == H1 for this config).
        h = jnp.maximum(
            jnp.dot(h, wtail_ref[:, 0:H1], preferred_element_type=jnp.float32)
            + bias_ref[:, WWC + H0:WWC + H0 + H1], 0.0)                         # (B, H1)
        heads = (jnp.dot(h, wtail_ref[:, H1:H1 + HEAD_W],
                         preferred_element_type=jnp.float32)
                 + bias_ref[:, WWC + H0 + H1:WWC + H0 + H1 + HEAD_W])           # (B, 8)

        # ---------------- rsample + Normal log_prob + tanh squashing ----------------
        mu = heads[:, 0:ACT_DIM]
        log_std = jnp.clip(heads[:, ACT_DIM:HEAD_W], LOG_STD_MIN, LOG_STD_MAX)
        std = jnp.exp(log_std)
        eps_v = eps_ref[...]
        pi = mu + std * eps_v                           # rsample
        # Normal(mu, std).log_prob(pi) with pi - mu == std * eps exactly:
        #   -0.5*eps^2 - log_std - log(sqrt(2*pi))
        # (the spec module sums plain Normal log_prob; no tanh correction term)
        logp = (jnp.sum(-0.5 * eps_v * eps_v - log_std, axis=-1, keepdims=True)
                - ACT_DIM * _LOG_SQRT_2PI)

        # single dense lane-padded store: [tanh(pi) | tanh(mu) | logp | zeros]
        out_ref[...] = jnp.concatenate(
            [jnp.tanh(pi), jnp.tanh(mu), logp,
             jnp.zeros((B, OUT_W - HEAD_W - 1), jnp.float32)], axis=-1)

    # ---- wrapper-side layout prep (3 tiny XLA ops on ~83 KB; no im2col chain) ----
    x = jnp.transpose(obs_nchw, (0, 2, 3, 1))                         # NCHW -> NHWC
    xp = jnp.pad(x, ((0, 0), (1, 1), (1, 1), (0, 0)))                 # conv padding=1
    # rows -> (h_parity, h_half_index, batch), lanes -> (w_padded, c_in)
    xr = jnp.transpose(xp.reshape(B, 9, 2, KW), (2, 1, 0, 3)).reshape(2 * 9 * B, KW)

    out = pl.pallas_call(
        kernel,
        out_shape=jax.ShapeDtypeStruct((B, OUT_W), jnp.float32),
        scratch_shapes=[pltpu.VMEM((ROWS, WWC), jnp.float32)],        # pooled buffer
    )(xr, params["wcomb"], params["w1seg"], params["wtail"],
      params["bias_all"], eps)

    return out[:, 0:ACT_DIM], out[:, ACT_DIM:HEAD_W], out[:, HEAD_W]


# =====================================================================================
# Deterministic synthetic parameters + one-time host-side packing into kernel layouts
# =====================================================================================
def init_params(key):
    ks = jax.random.split(key, 10)
    n = lambda k, shape, s: s * jax.random.normal(k, shape, jnp.float32)
    wconv_hwio = n(ks[0], (3, 3, C_IN, CNN_OUT), 0.1)        # HWIO conv weight
    bconv = n(ks[1], (1, CNN_OUT), 0.1)
    w1 = n(ks[2], (FLAT, H0), 0.05)       # rows in PyTorch flatten order (c, hh, ww)
    b1 = n(ks[3], (1, H0), 0.05)
    w2 = n(ks[4], (H0, H1), 0.1)
    b2 = n(ks[5], (1, H1), 0.1)
    wmu = n(ks[6], (H1, ACT_DIM), 0.1)
    bmu = n(ks[7], (1, ACT_DIM), 0.1)
    wls = n(ks[8], (H1, ACT_DIM), 0.1)
    bls = n(ks[9], (1, ACT_DIM), 0.1)

    # ---- block-diagonal per-tap conv weights: wcomb[dy, s][(wp,c), (ww,co)] ----
    # Folds the 3 dx taps and the w-parity (pool offset s) selection into the
    # matmul weight, so the kernel LHS is always a contiguous row window.
    whwio = np.asarray(wconv_hwio)
    wcomb = np.zeros((3, 2, KW, WWC), np.float32)
    for dy in range(3):
        for s in range(2):
            for ww in range(WW):
                for dx in range(3):
                    wp = 2 * ww + s + dx                     # padded w column, 0..17
                    wcomb[dy, s, wp * C_IN:(wp + 1) * C_IN,
                          ww * CNN_OUT:(ww + 1) * CNN_OUT] = whwio[dy, dx]
    wcomb = jnp.asarray(wcomb.reshape(3 * 2, KW, WWC))

    # ---- fold the PyTorch NCHW flatten into per-hh (ww, c_out)-ordered W1 segments ----
    w1seg = jnp.asarray(
        np.asarray(w1).reshape(CNN_OUT, HH, WW, H0)          # (co, hh, ww, j)
        .transpose(1, 2, 0, 3)                               # (hh, ww, co, j)
        .reshape(HH, WWC, H0))

    # ---- pack the small MLP weights / all biases into two lane slabs ----
    whead = jnp.concatenate([wmu, wls], axis=1)              # (H1, 2*ACT_DIM)
    wtail = jnp.concatenate([w2, whead], axis=1)             # (H0, H1+8)  (H0 == H1)
    bias_all = jnp.concatenate(
        [jnp.tile(bconv, (1, WW)),                           # (1, 144) pooled-lane bias
         b1, b2, jnp.concatenate([bmu, bls], axis=1)], axis=1)   # (1, 216)

    return dict(
        # reference-layout params
        wconv_hwio=wconv_hwio, bconv=bconv, w1=w1, b1=b1, w2=w2, b2=b2,
        wmu=wmu, bmu=bmu, wls=wls, bls=bls,
        # kernel-layout params
        wcomb=wcomb, w1seg=w1seg, wtail=wtail, bias_all=bias_all,
    )


# =====================================================================================
# Pure-JAX reference for validation
# =====================================================================================
def reference_forward(obs_nchw, params, eps):
    x = jnp.transpose(obs_nchw, (0, 2, 3, 1))
    y = jax.lax.conv_general_dilated(
        x, params["wconv_hwio"], window_strides=(1, 1), padding="SAME",
        dimension_numbers=("NHWC", "HWIO", "NHWC"))
    y = jnp.maximum(y + params["bconv"].reshape(1, 1, 1, -1), 0.0)
    B = y.shape[0]
    y = y.reshape(B, HH, 2, WW, 2, CNN_OUT).max(axis=(2, 4))
    flat = jnp.transpose(y, (0, 3, 1, 2)).reshape(B, FLAT)       # PyTorch (c,hh,ww) order
    h = jnp.maximum(flat @ params["w1"] + params["b1"], 0.0)
    h = jnp.maximum(h @ params["w2"] + params["b2"], 0.0)
    mu = h @ params["wmu"] + params["bmu"]
    log_std = jnp.clip(h @ params["wls"] + params["bls"], LOG_STD_MIN, LOG_STD_MAX)
    std = jnp.exp(log_std)
    pi = mu + std * eps
    logp = jnp.sum(-((pi - mu) ** 2) / (2.0 * std * std) - jnp.log(std) - _LOG_SQRT_2PI,
                   axis=-1)
    return jnp.tanh(pi), jnp.tanh(mu), logp


if __name__ == "__main__":
    key = jax.random.PRNGKey(0)
    k_obs, k_params, k_eps = jax.random.split(key, 3)

    obs = jax.random.normal(k_obs, (BATCH,) + OBS_DIM, jnp.float32)   # NCHW
    params = init_params(k_params)
    # rsample noise (torch draws it internally from its own RNG; generated here)
    eps = jax.random.normal(k_eps, (BATCH, ACT_DIM), jnp.float32)

    pi_action, clipped_mu, logp_pi = jax.jit(actor_forward)(obs, params, eps)
    jax.block_until_ready((pi_action, clipped_mu, logp_pi))

    assert pi_action.shape == (BATCH, ACT_DIM)
    assert clipped_mu.shape == (BATCH, ACT_DIM)
    assert logp_pi.shape == (BATCH,)

    ref_pi, ref_mu, ref_logp = reference_forward(obs, params, eps)
    np.testing.assert_allclose(np.asarray(pi_action), np.asarray(ref_pi),
                               rtol=2e-2, atol=2e-2)
    np.testing.assert_allclose(np.asarray(clipped_mu), np.asarray(ref_mu),
                               rtol=2e-2, atol=2e-2)
    np.testing.assert_allclose(np.asarray(logp_pi), np.asarray(ref_logp),
                               rtol=2e-2, atol=2e-2)

    print("KERNEL_OK")
</pallas_src>

<mosaic_0001>
module attributes {stable_mosaic.version = 11 : i64} {
  func.func @kernel(%arg0: memref<36x72xf32, #tpu.memory_space<vmem>>, %arg1: memref<6x72x144xf32, #tpu.memory_space<vmem>>, %arg2: memref<8x144x32xf32, #tpu.memory_space<vmem>>, %arg3: memref<32x40xf32, #tpu.memory_space<vmem>>, %arg4: memref<1x216xf32, #tpu.memory_space<vmem>>, %arg5: memref<2x4xf32, #tpu.memory_space<vmem>>, %arg6: memref<2x16xf32, #tpu.memory_space<vmem>>, %arg7: memref<16x144xf32, #tpu.memory_space<vmem>>) attributes {dimension_semantics = [], scalar_prefetch = 0 : i64, scratch_operands = 1 : i64, tpu.core_type = #tpu.core_type<tc>} {
    %c0 = arith.constant 0 : index
    %c0_0 = arith.constant 0 : index
    %0 = vector.load %arg0[%c0, %c0_0] : memref<36x72xf32, #tpu.memory_space<vmem>>, vector<16x72xf32>
    %c18 = arith.constant 18 : index
    %c0_1 = arith.constant 0 : index
    %1 = vector.load %arg0[%c18, %c0_1] : memref<36x72xf32, #tpu.memory_space<vmem>>, vector<16x72xf32>
    %c2 = arith.constant 2 : index
    %c0_2 = arith.constant 0 : index
    %2 = vector.load %arg0[%c2, %c0_2] : memref<36x72xf32, #tpu.memory_space<vmem>>, vector<16x72xf32>
    %c20 = arith.constant 20 : index
    %c0_3 = arith.constant 0 : index
    %3 = vector.load %arg0[%c20, %c0_3] : memref<36x72xf32, #tpu.memory_space<vmem>>, vector<16x72xf32>
    %c0_4 = arith.constant 0 : index
    %c0_5 = arith.constant 0 : index
    %c0_6 = arith.constant 0 : index
    %4 = vector.load %arg1[%c0_4, %c0_5, %c0_6] : memref<6x72x144xf32, #tpu.memory_space<vmem>>, vector<1x72x144xf32>
    %5 = vector.shape_cast %4 : vector<1x72x144xf32> to vector<72x144xf32>
    %cst = arith.constant dense<0.000000e+00> : vector<16x144xf32>
    %6 = tpu.matmul %0, %5, %cst {dimension_numbers = #tpu.dot_dimension_numbers<[1], [0], [0], [1], [0, 0, 1, 1], [], []>} : vector<16x72xf32>, vector<72x144xf32>, vector<16x144xf32> -> vector<16x144xf32>
    %cst_7 = arith.constant dense<0.000000e+00> : vector<16x144xf32>
    %7 = tpu.matmul %1, %5, %cst_7 {dimension_numbers = #tpu.dot_dimension_numbers<[1], [0], [0], [1], [0, 0, 1, 1], [], []>} : vector<16x72xf32>, vector<72x144xf32>, vector<16x144xf32> -> vector<16x144xf32>
    %c1 = arith.constant 1 : index
    %c0_8 = arith.constant 0 : index
    %c0_9 = arith.constant 0 : index
    %8 = vector.load %arg1[%c1, %c0_8, %c0_9] : memref<6x72x144xf32, #tpu.memory_space<vmem>>, vector<1x72x144xf32>
    %9 = vector.shape_cast %8 : vector<1x72x144xf32> to vector<72x144xf32>
    %cst_10 = arith.constant dense<0.000000e+00> : vector<16x144xf32>
    %10 = tpu.matmul %0, %9, %cst_10 {dimension_numbers = #tpu.dot_dimension_numbers<[1], [0], [0], [1], [0, 0, 1, 1], [], []>} : vector<16x72xf32>, vector<72x144xf32>, vector<16x144xf32> -> vector<16x144xf32>
    %cst_11 = arith.constant dense<0.000000e+00> : vector<16x144xf32>
    %11 = tpu.matmul %1, %9, %cst_11 {dimension_numbers = #tpu.dot_dimension_numbers<[1], [0], [0], [1], [0, 0, 1, 1], [], []>} : vector<16x72xf32>, vector<72x144xf32>, vector<16x144xf32> -> vector<16x144xf32>
    %c2_12 = arith.constant 2 : index
    %c0_13 = arith.constant 0 : index
    %c0_14 = arith.constant 0 : index
    %12 = vector.load %arg1[%c2_12, %c0_13, %c0_14] : memref<6x72x144xf32, #tpu.memory_space<vmem>>, vector<1x72x144xf32>
    %13 = vector.shape_cast %12 : vector<1x72x144xf32> to vector<72x144xf32>
    %cst_15 = arith.constant dense<0.000000e+00> : vector<16x144xf32>
    %14 = tpu.matmul %1, %13, %cst_15 {dimension_numbers = #tpu.dot_dimension_numbers<[1], [0], [0], [1], [0, 0, 1, 1], [], []>} : vector<16x72xf32>, vector<72x144xf32>, vector<16x144xf32> -> vector<16x144xf32>
    %15 = arith.addf %6, %14 : vector<16x144xf32>
    %cst_16 = arith.constant dense<0.000000e+00> : vector<16x144xf32>
    %16 = tpu.matmul %2, %13, %cst_16 {dimension_numbers = #tpu.dot_dimension_numbers<[1], [0], [0], [1], [0, 0, 1, 1], [], []>} : vector<16x72xf32>, vector<72x144xf32>, vector<16x144xf32> -> vector<16x144xf32>
    %17 = arith.addf %7, %16 : vector<16x144xf32>
    %c3 = arith.constant 3 : index
    %c0_17 = arith.constant 0 : index
    %c0_18 = arith.constant 0 : index
    %18 = vector.load %arg1[%c3, %c0_17, %c0_18] : memref<6x72x144xf32, #tpu.memory_space<vmem>>, vector<1x72x144xf32>
    %19 = vector.shape_cast %18 : vector<1x72x144xf32> to vector<72x144xf32>
    %cst_19 = arith.constant dense<0.000000e+00> : vector<16x144xf32>
    %20 = tpu.matmul %1, %19, %cst_19 {dimension_numbers = #tpu.dot_dimension_numbers<[1], [0], [0], [1], [0, 0, 1, 1], [], []>} : vector<16x72xf32>, vector<72x144xf32>, vector<16x144xf32> -> vector<16x144xf32>
    %21 = arith.addf %10, %20 : vector<16x144xf32>
    %cst_20 = arith.constant dense<0.000000e+00> : vector<16x144xf32>
    %22 = tpu.matmul %2, %19, %cst_20 {dimension_numbers = #tpu.dot_dimension_numbers<[1], [0], [0], [1], [0, 0, 1, 1], [], []>} : vector<16x72xf32>, vector<72x144xf32>, vector<16x144xf32> -> vector<16x144xf32>
    %23 = arith.addf %11, %22 : vector<16x144xf32>
    %c4 = arith.constant 4 : index
    %c0_21 = arith.constant 0 : index
    %c0_22 = arith.constant 0 : index
    %24 = vector.load %arg1[%c4, %c0_21, %c0_22] : memref<6x72x144xf32, #tpu.memory_space<vmem>>, vector<1x72x144xf32>
    %25 = vector.shape_cast %24 : vector<1x72x144xf32> to vector<72x144xf32>
    %cst_23 = arith.constant dense<0.000000e+00> : vector<16x144xf32>
    %26 = tpu.matmul %2, %25, %cst_23 {dimension_numbers = #tpu.dot_dimension_numbers<[1], [0], [0], [1], [0, 0, 1, 1], [], []>} : vector<16x72xf32>, vector<72x144xf32>, vector<16x144xf32> -> vector<16x144xf32>
    %27 = arith.addf %15, %26 : vector<16x144xf32>
    %cst_24 = arith.constant dense<0.000000e+00> : vector<16x144xf32>
    %28 = tpu.matmul %3, %25, %cst_24 {dimension_numbers = #tpu.dot_dimension_numbers<[1], [0], [0], [1], [0, 0, 1, 1], [], []>} : vector<16x72xf32>, vector<72x144xf32>, vector<16x144xf32> -> vector<16x144xf32>
    %29 = arith.addf %17, %28 : vector<16x144xf32>
    %c5 = arith.constant 5 : index
    %c0_25 = arith.constant 0 : index
    %c0_26 = arith.constant 0 : index
    %30 = vector.load %arg1[%c5, %c0_25, %c0_26] : memref<6x72x144xf32, #tpu.memory_space<vmem>>, vector<1x72x144xf32>
    %31 = vector.shape_cast %30 : vector<1x72x144xf32> to vector<72x144xf32>
    %cst_27 = arith.constant dense<0.000000e+00> : vector<16x144xf32>
    %32 = tpu.matmul %2, %31, %cst_27 {dimension_numbers = #tpu.dot_dimension_numbers<[1], [0], [0], [1], [0, 0, 1, 1], [], []>} : vector<16x72xf32>, vector<72x144xf32>, vector<16x144xf32> -> vector<16x144xf32>
    %33 = arith.addf %21, %32 : vector<16x144xf32>
    %cst_28 = arith.constant dense<0.000000e+00> : vector<16x144xf32>
    %34 = tpu.matmul %3, %31, %cst_28 {dimension_numbers = #tpu.dot_dimension_numbers<[1], [0], [0], [1], [0, 0, 1, 1], [], []>} : vector<16x72xf32>, vector<72x144xf32>, vector<16x144xf32> -> vector<16x144xf32>
    %35 = arith.addf %23, %34 : vector<16x144xf32>
    %36 = arith.maximumf %27, %33 : vector<16x144xf32>
    %37 = arith.maximumf %29, %35 : vector<16x144xf32>
    %38 = arith.maximumf %36, %37 : vector<16x144xf32>
    %c0_29 = arith.constant 0 : index
    %c0_30 = arith.constant 0 : index
    %39 = vector.load %arg4[%c0_29, %c0_30] : memref<1x216xf32, #tpu.memory_space<vmem>>, vector<1x144xf32>
    %40 = vector.broadcast %39 : vector<1x144xf32> to vector<16x144xf32>
    %41 = arith.addf %38, %40 : vector<16x144xf32>
    %cst_31 = arith.constant 0.000000e+00 : f32
    %42 = vector.broadcast %cst_31 : f32 to vector<16x144xf32>
    %43 = arith.maximumf %41, %42 : vector<16x144xf32>
    %c0_32 = arith.constant 0 : index
    %c0_33 = arith.constant 0 : index
    %44 = vector.load %arg7[%c0_32, %c0_33] : memref<16x144xf32, #tpu.memory_space<vmem>>, vector<16x144xf32>
    tpu.vector_store %arg7[%c0_32, %c0_33], %43 {strides = array<i32>} : memref<16x144xf32, #tpu.memory_space<vmem>>, vector<16x144xf32>,
    %c0_34 = arith.constant 0 : index
    %c0_35 = arith.constant 0 : index
    %45 = vector.load %arg7[%c0_34, %c0_35] : memref<16x144xf32, #tpu.memory_space<vmem>>, vector<2x144xf32>
    %c0_36 = arith.constant 0 : index
    %c0_37 = arith.constant 0 : index
    %c0_38 = arith.constant 0 : index
    %46 = vector.load %arg2[%c0_36, %c0_37, %c0_38] : memref<8x144x32xf32, #tpu.memory_space<vmem>>, vector<1x144x32xf32>
    %47 = vector.shape_cast %46 : vector<1x144x32xf32> to vector<144x32xf32>
    %cst_39 = arith.constant dense<0.000000e+00> : vector<2x32xf32>
    %48 = tpu.matmul %45, %47, %cst_39 {dimension_numbers = #tpu.dot_dimension_numbers<[1], [0], [0], [1], [0, 0, 1, 1], [], []>} : vector<2x144xf32>, vector<144x32xf32>, vector<2x32xf32> -> vector<2x32xf32>
    %c2_40 = arith.constant 2 : index
    %c0_41 = arith.constant 0 : index
    %49 = vector.load %arg7[%c2_40, %c0_41] : memref<16x144xf32, #tpu.memory_space<vmem>>, vector<2x144xf32>
    %c1_42 = arith.constant 1 : index
    %c0_43 = arith.constant 0 : index
    %c0_44 = arith.constant 0 : index
    %50 = vector.load %arg2[%c1_42, %c0_43, %c0_44] : memref<8x144x32xf32, #tpu.memory_space<vmem>>, vector<1x144x32xf32>
    %51 = vector.shape_cast %50 : vector<1x144x32xf32> to vector<144x32xf32>
    %cst_45 = arith.constant dense<0.000000e+00> : vector<2x32xf32>
    %52 = tpu.matmul %49, %51, %cst_45 {dimension_numbers = #tpu.dot_dimension_numbers<[1], [0], [0], [1], [0, 0, 1, 1], [], []>} : vector<2x144xf32>, vector<144x32xf32>, vector<2x32xf32> -> vector<2x32xf32>
    %53 = arith.addf %48, %52 : vector<2x32xf32>
    %c4_46 = arith.constant 4 : index
    %c0_47 = arith.constant 0 : index
    %54 = vector.load %arg7[%c4_46, %c0_47] : memref<16x144xf32, #tpu.memory_space<vmem>>, vector<2x144xf32>
    %c2_48 = arith.constant 2 : index
    %c0_49 = arith.constant 0 : index
    %c0_50 = arith.constant 0 : index
    %55 = vector.load %arg2[%c2_48, %c0_49, %c0_50] : memref<8x144x32xf32, #tpu.memory_space<vmem>>, vector<1x144x32xf32>
    %56 = vector.shape_cast %55 : vector<1x144x32xf32> to vector<144x32xf32>
    %cst_51 = arith.constant dense<0.000000e+00> : vector<2x32xf32>
    %57 = tpu.matmul %54, %56, %cst_51 {dimension_numbers = #tpu.dot_dimension_numbers<[1], [0], [0], [1], [0, 0, 1, 1], [], []>} : vector<2x144xf32>, vector<144x32xf32>, vector<2x32xf32> -> vector<2x32xf32>
    %58 = arith.addf %53, %57 : vector<2x32xf32>
    %c6 = arith.constant 6 : index
    %c0_52 = arith.constant 0 : index
    %59 = vector.load %arg7[%c6, %c0_52] : memref<16x144xf32, #tpu.memory_space<vmem>>, vector<2x144xf32>
    %c3_53 = arith.constant 3 : index
    %c0_54 = arith.constant 0 : index
    %c0_55 = arith.constant 0 : index
    %60 = vector.load %arg2[%c3_53, %c0_54, %c0_55] : memref<8x144x32xf32, #tpu.memory_space<vmem>>, vector<1x144x32xf32>
    %61 = vector.shape_cast %60 : vector<1x144x32xf32> to vector<144x32xf32>
    %cst_56 = arith.constant dense<0.000000e+00> : vector<2x32xf32>
    %62 = tpu.matmul %59, %61, %cst_56 {dimension_numbers = #tpu.dot_dimension_numbers<[1], [0], [0], [1], [0, 0, 1, 1], [], []>} : vector<2x144xf32>, vector<144x32xf32>, vector<2x32xf32> -> vector<2x32xf32>
    %63 = arith.addf %58, %62 : vector<2x32xf32>
    %c8 = arith.constant 8 : index
    %c0_57 = arith.constant 0 : index
    %64 = vector.load %arg7[%c8, %c0_57] : memref<16x144xf32, #tpu.memory_space<vmem>>, vector<2x144xf32>
    %c4_58 = arith.constant 4 : index
    %c0_59 = arith.constant 0 : index
    %c0_60 = arith.constant 0 : index
    %65 = vector.load %arg2[%c4_58, %c0_59, %c0_60] : memref<8x144x32xf32, #tpu.memory_space<vmem>>, vector<1x144x32xf32>
    %66 = vector.shape_cast %65 : vector<1x144x32xf32> to vector<144x32xf32>
    %cst_61 = arith.constant dense<0.000000e+00> : vector<2x32xf32>
    %67 = tpu.matmul %64, %66, %cst_61 {dimension_numbers = #tpu.dot_dimension_numbers<[1], [0], [0], [1], [0, 0, 1, 1], [], []>} : vector<2x144xf32>, vector<144x32xf32>, vector<2x32xf32> -> vector<2x32xf32>
    %68 = arith.addf %63, %67 : vector<2x32xf32>
    %c10 = arith.constant 10 : index
    %c0_62 = arith.constant 0 : index
    %69 = vector.load %arg7[%c10, %c0_62] : memref<16x144xf32, #tpu.memory_space<vmem>>, vector<2x144xf32>
    %c5_63 = arith.constant 5 : index
    %c0_64 = arith.constant 0 : index
    %c0_65 = arith.constant 0 : index
    %70 = vector.load %arg2[%c5_63, %c0_64, %c0_65] : memref<8x144x32xf32, #tpu.memory_space<vmem>>, vector<1x144x32xf32>
    %71 = vector.shape_cast %70 : vector<1x144x32xf32> to vector<144x32xf32>
    %cst_66 = arith.constant dense<0.000000e+00> : vector<2x32xf32>
    %72 = tpu.matmul %69, %71, %cst_66 {dimension_numbers = #tpu.dot_dimension_numbers<[1], [0], [0], [1], [0, 0, 1, 1], [], []>} : vector<2x144xf32>, vector<144x32xf32>, vector<2x32xf32> -> vector<2x32xf32>
    %73 = arith.addf %68, %72 : vector<2x32xf32>
    %c12 = arith.constant 12 : index
    %c0_67 = arith.constant 0 : index
    %74 = vector.load %arg7[%c12, %c0_67] : memref<16x144xf32, #tpu.memory_space<vmem>>, vector<2x144xf32>
    %c6_68 = arith.constant 6 : index
    %c0_69 = arith.constant 0 : index
    %c0_70 = arith.constant 0 : index
    %75 = vector.load %arg2[%c6_68, %c0_69, %c0_70] : memref<8x144x32xf32, #tpu.memory_space<vmem>>, vector<1x144x32xf32>
    %76 = vector.shape_cast %75 : vector<1x144x32xf32> to vector<144x32xf32>
    %cst_71 = arith.constant dense<0.000000e+00> : vector<2x32xf32>
    %77 = tpu.matmul %74, %76, %cst_71 {dimension_numbers = #tpu.dot_dimension_numbers<[1], [0], [0], [1], [0, 0, 1, 1], [], []>} : vector<2x144xf32>, vector<144x32xf32>, vector<2x32xf32> -> vector<2x32xf32>
    %78 = arith.addf %73, %77 : vector<2x32xf32>
    %c14 = arith.constant 14 : index
    %c0_72 = arith.constant 0 : index
    %79 = vector.load %arg7[%c14, %c0_72] : memref<16x144xf32, #tpu.memory_space<vmem>>, vector<2x144xf32>
    %c7 = arith.constant 7 : index
    %c0_73 = arith.constant 0 : index
    %c0_74 = arith.constant 0 : index
    %80 = vector.load %arg2[%c7, %c0_73, %c0_74] : memref<8x144x32xf32, #tpu.memory_space<vmem>>, vector<1x144x32xf32>
    %81 = vector.shape_cast %80 : vector<1x144x32xf32> to vector<144x32xf32>
    %cst_75 = arith.constant dense<0.000000e+00> : vector<2x32xf32>
    %82 = tpu.matmul %79, %81, %cst_75 {dimension_numbers = #tpu.dot_dimension_numbers<[1], [0], [0], [1], [0, 0, 1, 1], [], []>} : vector<2x144xf32>, vector<144x32xf32>, vector<2x32xf32> -> vector<2x32xf32>
    %83 = arith.addf %78, %82 : vector<2x32xf32>
    %c0_76 = arith.constant 0 : index
    %c144 = arith.constant 144 : index
    %84 = vector.load %arg4[%c0_76, %c144] : memref<1x216xf32, #tpu.memory_space<vmem>>, vector<1x32xf32>
    %85 = vector.broadcast %84 : vector<1x32xf32> to vector<2x32xf32>
    %86 = arith.addf %83, %85 : vector<2x32xf32>
    %cst_77 = arith.constant 0.000000e+00 : f32
    %87 = vector.broadcast %cst_77 : f32 to vector<2x32xf32>
    %88 = arith.maximumf %86, %87 : vector<2x32xf32>
    %c0_78 = arith.constant 0 : index
    %c0_79 = arith.constant 0 : index
    %89 = vector.load %arg3[%c0_78, %c0_79] : memref<32x40xf32, #tpu.memory_space<vmem>>, vector<32x32xf32>
    %cst_80 = arith.constant dense<0.000000e+00> : vector<2x32xf32>
    %90 = tpu.matmul %88, %89, %cst_80 {dimension_numbers = #tpu.dot_dimension_numbers<[1], [0], [0], [1], [0, 0, 1, 1], [], []>} : vector<2x32xf32>, vector<32x32xf32>, vector<2x32xf32> -> vector<2x32xf32>
    %c0_81 = arith.constant 0 : index
    %c176 = arith.constant 176 : index
    %91 = vector.load %arg4[%c0_81, %c176] : memref<1x216xf32, #tpu.memory_space<vmem>>, vector<1x32xf32>
    %92 = vector.broadcast %91 : vector<1x32xf32> to vector<2x32xf32>
    %93 = arith.addf %90, %92 : vector<2x32xf32>
    %cst_82 = arith.constant 0.000000e+00 : f32
    %94 = vector.broadcast %cst_82 : f32 to vector<2x32xf32>
    %95 = arith.maximumf %93, %94 : vector<2x32xf32>
    %c0_83 = arith.constant 0 : index
    %c32 = arith.constant 32 : index
    %96 = vector.load %arg3[%c0_83, %c32] : memref<32x40xf32, #tpu.memory_space<vmem>>, vector<32x8xf32>
    %cst_84 = arith.constant dense<0.000000e+00> : vector<2x8xf32>
    %97 = tpu.matmul %95, %96, %cst_84 {dimension_numbers = #tpu.dot_dimension_numbers<[1], [0], [0], [1], [0, 0, 1, 1], [], []>} : vector<2x32xf32>, vector<32x8xf32>, vector<2x8xf32> -> vector<2x8xf32>
    %c0_85 = arith.constant 0 : index
    %c208 = arith.constant 208 : index
    %98 = vector.load %arg4[%c0_85, %c208] : memref<1x216xf32, #tpu.memory_space<vmem>>, vector<1x8xf32>
    %99 = vector.broadcast %98 : vector<1x8xf32> to vector<2x8xf32>
    %100 = arith.addf %97, %99 : vector<2x8xf32>
    %101 = vector.extract_strided_slice %100 {offsets = [0, 0], sizes = [2, 4], strides = [1, 1]} : vector<2x8xf32> to vector<2x4xf32>
    %102 = vector.extract_strided_slice %100 {offsets = [0, 4], sizes = [2, 4], strides = [1, 1]} : vector<2x8xf32> to vector<2x4xf32>
    %cst_86 = arith.constant -2.000000e+01 : f32
    %cst_87 = arith.constant 2.000000e+00 : f32
    %103 = vector.broadcast %cst_86 : f32 to vector<2x4xf32>
    %104 = arith.maximumf %103, %102 : vector<2x4xf32>
    %105 = vector.broadcast %cst_87 : f32 to vector<2x4xf32>
    %106 = arith.minimumf %105, %104 : vector<2x4xf32>
    %107 = math.exp %106 : vector<2x4xf32>
    %c0_88 = arith.constant 0 : index
    %c0_89 = arith.constant 0 : index
    %108 = vector.load %arg5[%c0_88, %c0_89] : memref<2x4xf32, #tpu.memory_space<vmem>>, vector<2x4xf32>
    %109 = arith.mulf %107, %108 : vector<2x4xf32>
    %110 = arith.addf %101, %109 : vector<2x4xf32>
    %cst_90 = arith.constant -5.000000e-01 : f32
    %111 = vector.broadcast %cst_90 : f32 to vector<2x4xf32>
    %112 = arith.mulf %111, %108 : vector<2x4xf32>
    %113 = arith.mulf %112, %108 : vector<2x4xf32>
    %114 = arith.subf %113, %106 : vector<2x4xf32>
    %cst_91 = arith.constant dense<0.000000e+00> : vector<2xf32>
    %115 = vector.multi_reduction <add>, %114, %cst_91 [1] : vector<2x4xf32> to vector<2xf32>
    %116 = vector.shape_cast %115 : vector<2xf32> to vector<2x1xf32>
    %cst_92 = arith.constant 3.67575407 : f32
    %117 = vector.broadcast %cst_92 : f32 to vector<2x1xf32>
    %118 = arith.subf %116, %117 : vector<2x1xf32>
    %119 = math.tanh %110 : vector<2x4xf32>
    %120 = math.tanh %101 : vector<2x4xf32>
    %cst_93 = arith.constant 0.000000e+00 : f32
    %121 = vector.broadcast %cst_93 : f32 to vector<2x7xf32>
    %122 = tpu.concatenate %119, %120, %118, %121 in 1 : vector<2x4xf32>, vector<2x4xf32>, vector<2x1xf32>, vector<2x7xf32> -> vector<2x16xf32>
    %c0_94 = arith.constant 0 : index
    %c0_95 = arith.constant 0 : index
    %123 = vector.load %arg6[%c0_94, %c0_95] : memref<2x16xf32, #tpu.memory_space<vmem>>, vector<2x16xf32>
    tpu.vector_store %arg6[%c0_94, %c0_95], %122 {strides = array<i32>} : memref<2x16xf32, #tpu.memory_space<vmem>>, vector<2x16xf32>,
    return
  }
}

</mosaic_0001>

<llo_original>
// kernel: actor_forward.1
$region0: #{actor_forward.1}
  #allocation0 [shape = 'u32[]', space=smem, size = 0x4, offset = 0x4, fixed_abs, tag = 'smem constant byte address 0x4 - core index']
  #allocation1 [shape = 'u32[144,128]{1,0:T(1,128)}', space=vmem, size = 0x12000, scoped, tag = 'internal scratch']
  #allocation2 [shape = 'f32[16,144]{1,0:T(8,128)}', space=vmem, size = 0x4000, scoped, tag = 'scratch operand']
  %s0 = inlined_call_operand.vmem [shape: f32[36,72], index: 0, kind: input, shape index: {}]
  %s1 = inlined_call_operand.vmem [shape: f32[6,72,144], index: 1, kind: input, shape index: {}]
  %s2 = inlined_call_operand.vmem [shape: f32[8,144,32], index: 2, kind: input, shape index: {}]
  %s3 = inlined_call_operand.vmem [shape: f32[32,40], index: 3, kind: input, shape index: {}]
  %s4 = inlined_call_operand.vmem [shape: f32[1,216], index: 4, kind: input, shape index: {}]
  %s5 = inlined_call_operand.vmem [shape: f32[2,4], index: 5, kind: input, shape index: {}]
  %s6 = inlined_call_operand.vmem [shape: f32[2,16], index: 6, kind: output, shape index: {}]
  %s7 = sld [smem:[#allocation0]]
  $region34: #{actor_forward.1} parent=0
    _
  %s9 = ssub.s32 1, %s7
  %s10 = scalar_select 0, %s9, %s7
  // Predicated region
  $region2: #{actor_forward.1} parent=0 // pred_check
    _
  $region3: #{actor_forward.1} parent=0 // pred_check_branch
    %12 = sbr.rel (0) target = $region5
  $region4: #{actor_forward.1} parent=0 // pred_region
    _
  $region5: #{actor_forward.1} parent=0 // pred_fallthru
    _
  // Predicated region
  $region6: #{actor_forward.1} parent=0 // pred_check
    _
  $region7: #{actor_forward.1} parent=0 // pred_check_branch
    %14 = sbr.rel (0) target = $region9
  $region8: #{actor_forward.1} parent=0 // pred_region
    _
  $region9: #{actor_forward.1} parent=0 // pred_fallthru
    _
  // Predicated region
  $region10: #{actor_forward.1} parent=0 // pred_check
    _
  $region11: #{actor_forward.1} parent=0 // pred_check_branch
    %16 = sbr.rel (0) target = $region13
  $region12: #{actor_forward.1} parent=0 // pred_region
    _
  $region13: #{actor_forward.1} parent=0 // pred_fallthru
    _
  // Predicated region
  $region14: #{actor_forward.1} parent=0 // pred_check
    _
  $region15: #{actor_forward.1} parent=0 // pred_check_branch
    %18 = sbr.rel (0) target = $region17
  $region16: #{actor_forward.1} parent=0 // pred_region
    _
  $region17: #{actor_forward.1} parent=0 // pred_fallthru
    _
  // Predicated region
  $region18: #{actor_forward.1} parent=0 // pred_check
    _
  $region19: #{actor_forward.1} parent=0 // pred_check_branch
    %20 = sbr.rel (0) target = $region21
  $region20: #{actor_forward.1} parent=0 // pred_region
    _
  $region21: #{actor_forward.1} parent=0 // pred_fallthru
    _
  // Predicated region
  $region22: #{actor_forward.1} parent=0 // pred_check
    _
  $region23: #{actor_forward.1} parent=0 // pred_check_branch
    %22 = sbr.rel (0) target = $region25
  $region24: #{actor_forward.1} parent=0 // pred_region
    _
  $region25: #{actor_forward.1} parent=0 // pred_fallthru
    _
  %v23 = vld [vmem:[%s0] sm:$0xff]
  %v24 = vld [vmem:[%s0 + $0x8] sm:$0xff]
  %v25 = vld [vmem:[%s0 + $0x12] sm:$0xff]
  %v26 = vld [vmem:[%s0 + $0x1a] sm:$0xff]
  %v27 = vld [vmem:[%s0 + $0x2] sm:$0xff]
  %v28 = vld [vmem:[%s0 + $0xa] sm:$0xff]
  %v29 = vld [vmem:[%s0 + $0x14] sm:$0xff]
  %v30 = vld [vmem:[%s0 + $0x1c] sm:$0xff]
  %v31 = vld [vmem:[%s1] sm:$0xff]
  %v32 = vld [vmem:[%s1 + $0x8] sm:$0xff]
  %v33 = vld [vmem:[%s1 + $0x10] sm:$0xff]
  %v34 = vld [vmem:[%s1 + $0x18] sm:$0xff]
  %v35 = vld [vmem:[%s1 + $0x20] sm:$0xff]
  %v36 = vld [vmem:[%s1 + $0x28] sm:$0xff]
  %v37 = vld [vmem:[%s1 + $0x30] sm:$0xff]
  %v38 = vld [vmem:[%s1 + $0x38] sm:$0xff]
  %v39 = vld [vmem:[%s1 + $0x40] sm:$0xff]
  %v40 = vld [vmem:[%s1 + $0x48] sm:$0xff]
  %v41 = vld [vmem:[%s1 + $0x50] sm:$0xff]
  %v42 = vld [vmem:[%s1 + $0x58] sm:$0xff]
  %v43 = vld [vmem:[%s1 + $0x60] sm:$0xff]
  %v44 = vld [vmem:[%s1 + $0x68] sm:$0xff]
  %v45 = vld [vmem:[%s1 + $0x70] sm:$0xff]
  %v46 = vld [vmem:[%s1 + $0x78] sm:$0xff]
  %v47 = vld [vmem:[%s1 + $0x80] sm:$0xff]
  %v48 = vld [vmem:[%s1 + $0x88] sm:$0xff]
  %s49 = scalar_lea.vmem %s1, 144
  %v50 = vld [vmem:[%s49] sm:$0xff]
  %v51 = vld [vmem:[%s49 + $0x8] sm:$0xff]
  %v52 = vld [vmem:[%s49 + $0x10] sm:$0xff]
  %v53 = vld [vmem:[%s49 + $0x18] sm:$0xff]
  %v54 = vld [vmem:[%s49 + $0x20] sm:$0xff]
  %v55 = vld [vmem:[%s49 + $0x28] sm:$0xff]
  %v56 = vld [vmem:[%s49 + $0x30] sm:$0xff]
  %v57 = vld [vmem:[%s49 + $0x38] sm:$0xff]
  %v58 = vld [vmem:[%s49 + $0x40] sm:$0xff]
  %v59 = vld [vmem:[%s49 + $0x48] sm:$0xff]
  %v60 = vld [vmem:[%s49 + $0x50] sm:$0xff]
  %v61 = vld [vmem:[%s49 + $0x58] sm:$0xff]
  %v62 = vld [vmem:[%s49 + $0x60] sm:$0xff]
  %v63 = vld [vmem:[%s49 + $0x68] sm:$0xff]
  %v64 = vld [vmem:[%s49 + $0x70] sm:$0xff]
  %v65 = vld [vmem:[%s49 + $0x78] sm:$0xff]
  %v66 = vld [vmem:[%s49 + $0x80] sm:$0xff]
  %v67 = vld [vmem:[%s49 + $0x88] sm:$0xff]
  %s68 = scalar_lea.vmem %s1, 288
  %v69 = vld [vmem:[%s68] sm:$0xff]
  %v70 = vld [vmem:[%s68 + $0x8] sm:$0xff]
  %v71 = vld [vmem:[%s68 + $0x10] sm:$0xff]
  %v72 = vld [vmem:[%s68 + $0x18] sm:$0xff]
  %v73 = vld [vmem:[%s68 + $0x20] sm:$0xff]
  %v74 = vld [vmem:[%s68 + $0x28] sm:$0xff]
  %v75 = vld [vmem:[%s68 + $0x30] sm:$0xff]
  %v76 = vld [vmem:[%s68 + $0x38] sm:$0xff]
  %v77 = vld [vmem:[%s68 + $0x40] sm:$0xff]
  %v78 = vld [vmem:[%s68 + $0x48] sm:$0xff]
  %v79 = vld [vmem:[%s68 + $0x50] sm:$0xff]
  %v80 = vld [vmem:[%s68 + $0x58] sm:$0xff]
  %v81 = vld [vmem:[%s68 + $0x60] sm:$0xff]
  %v82 = vld [vmem:[%s68 + $0x68] sm:$0xff]
  %v83 = vld [vmem:[%s68 + $0x70] sm:$0xff]
  %v84 = vld [vmem:[%s68 + $0x78] sm:$0xff]
  %v85 = vld [vmem:[%s68 + $0x80] sm:$0xff]
  %v86 = vld [vmem:[%s68 + $0x88] sm:$0xff]
  %vm87 = vcmask 588800
  %v89 = vsel %vm87, %v25, 0
  %v92 = vsel %vm87, %v26, 0
  %94 = vmatprep.subr.mxu0 %v70
  %95 = vmatpush1.msra.mxu0 %v69
  %96 = vmatprep.subr.mxu0 %v72
  %97 = vmatpush1.msra.mxu0 %v71
  %98 = vmatprep.subr.mxu0 %v74
  %99 = vmatpush1.msra.mxu0 %v73
  %100 = vmatprep.subr.mxu0 %v76
  %101 = vmatpush1.msra.mxu0 %v75
  %102 = vmatprep.subr.mxu0 %v78
  %103 = vmatpush1.msra.mxu0 %v77
  %104 = vmatprep.subr.mxu0 %v80
  %105 = vmatpush1.msra.mxu0 %v79
  %106 = vmatprep.subr.mxu0 %v82
  %107 = vmatpush1.msra.mxu0 %v81
  %108 = vmatprep.subr.mxu0 %v84
  %109 = vmatpush1.msra.mxu0 %v83
  %110 = vmatprep.subr.mxu0 %v86
  %111 = vmatpush1.msra.mxu0 %v85
  %112 = vmatprep.subr.mxu0 0.0
  %113 = vmatpush1.msra.mxu0 0.0
  %114 = vmatprep.subr.mxu0 0.0
  %115 = vmatpush1.msra.mxu0 0.0
  %116 = vmatprep.subr.mxu0 0.0
  %117 = vmatpush1.msra.mxu0 0.0
  %118 = vmatprep.subr.mxu0 0.0
  %119 = vmatpush1.msra.mxu0 0.0
  %120 = vmatprep.subr.mxu0 0.0
  %121 = vmatpush1.msra.mxu0 0.0
  %122 = vmatprep.subr.mxu0 0.0
  %123 = vmatpush1.msra.mxu0 0.0
  %124 = vmatprep.subr.mxu0 0.0
  %125 = vmatpush1.msra.mxu0 0.0
  %126 = vmatprep.subr.mxu0 0.0
  %127 = vmatpush1.msra.mxu0 0.0
  %128 = vmatprep.subr.mxu0 0.0
  %129 = vmatpush1.msra.mxu0 0.0
  %130 = vmatprep.subr.mxu0 0.0
  %131 = vmatpush1.msra.mxu0 0.0
  %132 = vmatprep.subr.mxu0 0.0
  %133 = vmatpush1.msra.mxu0 0.0
  %134 = vmatprep.subr.mxu0 0.0
  %135 = vmatpush1.msra.mxu0 0.0
  %136 = vmatprep.subr.mxu0 0.0
  %137 = vmatpush1.msra.mxu0 0.0
  %138 = vmatprep.subr.mxu0 0.0
  %139 = vmatpush1.msra.mxu0 0.0
  %140 = vmatprep.subr.mxu0 0.0
  %141 = vmatpush1.msra.mxu0 0.0
  %142 = vmatprep.subr.mxu0 0.0
  %143 = vmatpush1.msra.mxu0 0.0
  %144 = vmatprep.subr.mxu0 0.0
  %145 = vmatpush1.msra.mxu0 0.0
  %146 = vmatprep.subr.mxu0 0.0
  %147 = vmatpush1.msra.mxu0 0.0
  %148 = vmatprep.subr.mxu0 0.0
  %149 = vmatpush1.msra.mxu0 0.0
  %150 = vmatprep.subr.mxu0 0.0
  %151 = vmatpush1.msra.mxu0 0.0
  %152 = vmatprep.subr.mxu0 0.0
  %153 = vmatpush1.msra.mxu0 0.0
  %154 = vmatprep.subr.mxu0 0.0
  %155 = vmatpush1.msra.mxu0 0.0
  %156 = vmatprep.subr.mxu0 0.0
  %157 = vmatpush1.msra.mxu0 0.0
  %158 = vmatprep.mubr.f32.mxu0 0.0
  %159 = vmatmul.mubr.f32.gmra.mrb[0].mxu0 %v89
  %v160 = vpop.f32.mrb[0].mxu0
  %v161 = vadd.f32 0.0, %v160
  %v162 = vpop.f32.mrb[0].mxu0
  %v163 = vadd.f32 0.0, %v162
  %164 = vmatprep.mubr.f32.mxu0 0.0
  %165 = vmatmul.mubr.f32.gmra.mrb[0].mxu0 %v92
  %v166 = vpop.f32.mrb[0].mxu0
  %v167 = vadd.f32 0.0, %v166
  %v168 = vpop.f32.mrb[0].mxu0
  %v169 = vadd.f32 0.0, %v168
  %170 = vdwg.mxu0
  %v172 = vsel %vm87, %v23, 0
  %v175 = vsel %vm87, %v24, 0
  %177 = vmatprep.subr.mxu0 %v32
  %178 = vmatpush1.msra.mxu0 %v31
  %179 = vmatprep.subr.mxu0 %v34
  %180 = vmatpush1.msra.mxu0 %v33
  %181 = vmatprep.subr.mxu0 %v36
  %182 = vmatpush1.msra.mxu0 %v35
  %183 = vmatprep.subr.mxu0 %v38
  %184 = vmatpush1.msra.mxu0 %v37
  %185 = vmatprep.subr.mxu0 %v40
  %186 = vmatpush1.msra.mxu0 %v39
  %187 = vmatprep.subr.mxu0 %v42
  %188 = vmatpush1.msra.mxu0 %v41
  %189 = vmatprep.subr.mxu0 %v44
  %190 = vmatpush1.msra.mxu0 %v43
  %191 = vmatprep.subr.mxu0 %v46
  %192 = vmatpush1.msra.mxu0 %v45
  %193 = vmatprep.subr.mxu0 %v48
  %194 = vmatpush1.msra.mxu0 %v47
  %195 = vmatprep.subr.mxu0 0.0
  %196 = vmatpush1.msra.mxu0 0.0
  %197 = vmatprep.subr.mxu0 0.0
  %198 = vmatpush1.msra.mxu0 0.0
  %199 = vmatprep.subr.mxu0 0.0
  %200 = vmatpush1.msra.mxu0 0.0
  %201 = vmatprep.subr.mxu0 0.0
  %202 = vmatpush1.msra.mxu0 0.0
  %203 = vmatprep.subr.mxu0 0.0
  %204 = vmatpush1.msra.mxu0 0.0
  %205 = vmatprep.subr.mxu0 0.0
  %206 = vmatpush1.msra.mxu0 0.0
  %207 = vmatprep.subr.mxu0 0.0
  %208 = vmatpush1.msra.mxu0 0.0
  %209 = vmatprep.subr.mxu0 0.0
  %210 = vmatpush1.msra.mxu0 0.0
  %211 = vmatprep.subr.mxu0 0.0
  %212 = vmatpush1.msra.mxu0 0.0
  %213 = vmatprep.subr.mxu0 0.0
  %214 = vmatpush1.msra.mxu0 0.0
  %215 = vmatprep.subr.mxu0 0.0
  %216 = vmatpush1.msra.mxu0 0.0
  %217 = vmatprep.subr.mxu0 0.0
  %218 = vmatpush1.msra.mxu0 0.0
  %219 = vmatprep.subr.mxu0 0.0
  %220 = vmatpush1.msra.mxu0 0.0
  %221 = vmatprep.subr.mxu0 0.0
  %222 = vmatpush1.msra.mxu0 0.0
  %223 = vmatprep.subr.mxu0 0.0
  %224 = vmatpush1.msra.mxu0 0.0
  %225 = vmatprep.subr.mxu0 0.0
  %226 = vmatpush1.msra.mxu0 0.0
  %227 = vmatprep.subr.mxu0 0.0
  %228 = vmatpush1.msra.mxu0 0.0
  %229 = vmatprep.subr.mxu0 0.0
  %230 = vmatpush1.msra.mxu0 0.0
  %231 = vmatprep.subr.mxu0 0.0
  %232 = vmatpush1.msra.mxu0 0.0
  %233 = vmatprep.subr.mxu0 0.0
  %234 = vmatpush1.msra.mxu0 0.0
  %235 = vmatprep.subr.mxu0 0.0
  %236 = vmatpush1.msra.mxu0 0.0
  %237 = vmatprep.subr.mxu0 0.0
  %238 = vmatpush1.msra.mxu0 0.0
  %239 = vmatprep.subr.mxu0 0.0
  %240 = vmatpush1.msra.mxu0 0.0
  %241 = vmatprep.mubr.f32.mxu0 0.0
  %242 = vmatmul.mubr.f32.gmra.mrb[0].mxu0 %v172
  %v243 = vpop.f32.mrb[0].mxu0
  %v244 = vadd.f32 %v161, %v243
  %v245 = vpop.f32.mrb[0].mxu0
  %v246 = vadd.f32 %v163, %v245
  %247 = vmatprep.mubr.f32.mxu0 0.0
  %248 = vmatmul.mubr.f32.gmra.mrb[0].mxu0 %v175
  %v249 = vpop.f32.mrb[0].mxu0
  %v250 = vadd.f32 %v167, %v249
  %v251 = vpop.f32.mrb[0].mxu0
  %v252 = vadd.f32 %v169, %v251
  %253 = vdwg.mxu0
  %v255 = vsel %vm87, %v27, 0
  %v258 = vsel %vm87, %v28, 0
  %260 = vmatprep.subr.mxu0 %v70
  %261 = vmatpush1.msra.mxu0 %v69
  %262 = vmatprep.subr.mxu0 %v72
  %263 = vmatpush1.msra.mxu0 %v71
  %264 = vmatprep.subr.mxu0 %v74
  %265 = vmatpush1.msra.mxu0 %v73
  %266 = vmatprep.subr.mxu0 %v76
  %267 = vmatpush1.msra.mxu0 %v75
  %268 = vmatprep.subr.mxu0 %v78
  %269 = vmatpush1.msra.mxu0 %v77
  %270 = vmatprep.subr.mxu0 %v80
  %271 = vmatpush1.msra.mxu0 %v79
  %272 = vmatprep.subr.mxu0 %v82
  %273 = vmatpush1.msra.mxu0 %v81
  %274 = vmatprep.subr.mxu0 %v84
  %275 = vmatpush1.msra.mxu0 %v83
  %276 = vmatprep.subr.mxu0 %v86
  %277 = vmatpush1.msra.mxu0 %v85
  %278 = vmatprep.subr.mxu0 0.0
  %279 = vmatpush1.msra.mxu0 0.0
  %280 = vmatprep.subr.mxu0 0.0
  %281 = vmatpush1.msra.mxu0 0.0
  %282 = vmatprep.subr.mxu0 0.0
  %283 = vmatpush1.msra.mxu0 0.0
  %284 = vmatprep.subr.mxu0 0.0
  %285 = vmatpush1.msra.mxu0 0.0
  %286 = vmatprep.subr.mxu0 0.0
  %287 = vmatpush1.msra.mxu0 0.0
  %288 = vmatprep.subr.mxu0 0.0
  %289 = vmatpush1.msra.mxu0 0.0
  %290 = vmatprep.subr.mxu0 0.0
  %291 = vmatpush1.msra.mxu0 0.0
  %292 = vmatprep.subr.mxu0 0.0
  %293 = vmatpush1.msra.mxu0 0.0
  %294 = vmatprep.subr.mxu0 0.0
  %295 = vmatpush1.msra.mxu0 0.0
  %296 = vmatprep.subr.mxu0 0.0
  %297 = vmatpush1.msra.mxu0 0.0
  %298 = vmatprep.subr.mxu0 0.0
  %299 = vmatpush1.msra.mxu0 0.0
  %300 = vmatprep.subr.mxu0 0.0
  %301 = vmatpush1.msra.mxu0 0.0
  %302 = vmatprep.subr.mxu0 0.0
  %303 = vmatpush1.msra.mxu0 0.0
  %304 = vmatprep.subr.mxu0 0.0
  %305 = vmatpush1.msra.mxu0 0.0
  %306 = vmatprep.subr.mxu0 0.0
  %307 = vmatpush1.msra.mxu0 0.0
  %308 = vmatprep.subr.mxu0 0.0
  %309 = vmatpush1.msra.mxu0 0.0
  %310 = vmatprep.subr.mxu0 0.0
  %311 = vmatpush1.msra.mxu0 0.0
  %312 = vmatprep.subr.mxu0 0.0
  %313 = vmatpush1.msra.mxu0 0.0
  %314 = vmatprep.subr.mxu0 0.0
  %315 = vmatpush1.msra.mxu0 0.0
  %316 = vmatprep.subr.mxu0 0.0
  %317 = vmatpush1.msra.mxu0 0.0
  %318 = vmatprep.subr.mxu0 0.0
  %319 = vmatpush1.msra.mxu0 0.0
  %320 = vmatprep.subr.mxu0 0.0
  %321 = vmatpush1.msra.mxu0 0.0
  %322 = vmatprep.subr.mxu0 0.0
  %323 = vmatpush1.msra.mxu0 0.0
  %324 = vmatprep.mubr.f32.mxu0 0.0
  %325 = vmatmul.mubr.f32.gmra.mrb[0].mxu0 %v255
  %v326 = vpop.f32.mrb[0].mxu0
  %v327 = vadd.f32 0.0, %v326
  %v328 = vpop.f32.mrb[0].mxu0
  %v329 = vadd.f32 0.0, %v328
  %330 = vmatprep.mubr.f32.mxu0 0.0
  %331 = vmatmul.mubr.f32.gmra.mrb[0].mxu0 %v258
  %v332 = vpop.f32.mrb[0].mxu0
  %v333 = vadd.f32 0.0, %v332
  %v334 = vpop.f32.mrb[0].mxu0
  %v335 = vadd.f32 0.0, %v334
  %336 = vdwg.mxu0
  %337 = vmatprep.subr.mxu0 %v32
  %338 = vmatpush1.msra.mxu0 %v31
  %339 = vmatprep.subr.mxu0 %v34
  %340 = vmatpush1.msra.mxu0 %v33
  %341 = vmatprep.subr.mxu0 %v36
  %342 = vmatpush1.msra.mxu0 %v35
  %343 = vmatprep.subr.mxu0 %v38
  %344 = vmatpush1.msra.mxu0 %v37
  %345 = vmatprep.subr.mxu0 %v40
  %346 = vmatpush1.msra.mxu0 %v39
  %347 = vmatprep.subr.mxu0 %v42
  %348 = vmatpush1.msra.mxu0 %v41
  %349 = vmatprep.subr.mxu0 %v44
  %350 = vmatpush1.msra.mxu0 %v43
  %351 = vmatprep.subr.mxu0 %v46
  %352 = vmatpush1.msra.mxu0 %v45
  %353 = vmatprep.subr.mxu0 %v48
  %354 = vmatpush1.msra.mxu0 %v47
  %355 = vmatprep.subr.mxu0 0.0
  %356 = vmatpush1.msra.mxu0 0.0
  %357 = vmatprep.subr.mxu0 0.0
  %358 = vmatpush1.msra.mxu0 0.0
  %359 = vmatprep.subr.mxu0 0.0
  %360 = vmatpush1.msra.mxu0 0.0
  %361 = vmatprep.subr.mxu0 0.0
  %362 = vmatpush1.msra.mxu0 0.0
  %363 = vmatprep.subr.mxu0 0.0
  %364 = vmatpush1.msra.mxu0 0.0
  %365 = vmatprep.subr.mxu0 0.0
  %366 = vmatpush1.msra.mxu0 0.0
  %367 = vmatprep.subr.mxu0 0.0
  %368 = vmatpush1.msra.mxu0 0.0
  %369 = vmatprep.subr.mxu0 0.0
  %370 = vmatpush1.msra.mxu0 0.0
  %371 = vmatprep.subr.mxu0 0.0
  %372 = vmatpush1.msra.mxu0 0.0
  %373 = vmatprep.subr.mxu0 0.0
  %374 = vmatpush1.msra.mxu0 0.0
  %375 = vmatprep.subr.mxu0 0.0
  %376 = vmatpush1.msra.mxu0 0.0
  %377 = vmatprep.subr.mxu0 0.0
  %378 = vmatpush1.msra.mxu0 0.0
  %379 = vmatprep.subr.mxu0 0.0
  %380 = vmatpush1.msra.mxu0 0.0
  %381 = vmatprep.subr.mxu0 0.0
  %382 = vmatpush1.msra.mxu0 0.0
  %383 = vmatprep.subr.mxu0 0.0
  %384 = vmatpush1.msra.mxu0 0.0
  %385 = vmatprep.subr.mxu0 0.0
  %386 = vmatpush1.msra.mxu0 0.0
  %387 = vmatprep.subr.mxu0 0.0
  %388 = vmatpush1.msra.mxu0 0.0
  %389 = vmatprep.subr.mxu0 0.0
  %390 = vmatpush1.msra.mxu0 0.0
  %391 = vmatprep.subr.mxu0 0.0
  %392 = vmatpush1.msra.mxu0 0.0
  %393 = vmatprep.subr.mxu0 0.0
  %394 = vmatpush1.msra.mxu0 0.0
  %395 = vmatprep.subr.mxu0 0.0
  %396 = vmatpush1.msra.mxu0 0.0
  %397 = vmatprep.subr.mxu0 0.0
  %398 = vmatpush1.msra.mxu0 0.0
  %399 = vmatprep.subr.mxu0 0.0
  %400 = vmatpush1.msra.mxu0 0.0
  %401 = vmatprep.mubr.f32.mxu0 0.0
  %402 = vmatmul.mubr.f32.gmra.mrb[0].mxu0 %v89
  %v403 = vpop.f32.mrb[0].mxu0
  %v404 = vadd.f32 %v327, %v403
  %v405 = vpop.f32.mrb[0].mxu0
  %v406 = vadd.f32 %v329, %v405
  %407 = vmatprep.mubr.f32.mxu0 0.0
  %408 = vmatmul.mubr.f32.gmra.mrb[0].mxu0 %v92
  %v409 = vpop.f32.mrb[0].mxu0
  %v410 = vadd.f32 %v333, %v409
  %v411 = vpop.f32.mrb[0].mxu0
  %v412 = vadd.f32 %v335, %v411
  %413 = vdwg.mxu0
  %s414 = scalar_lea.vmem %s1, 432
  %v415 = vld [vmem:[%s414] sm:$0xff]
  %v416 = vld [vmem:[%s414 + $0x8] sm:$0xff]
  %v417 = vld [vmem:[%s414 + $0x10] sm:$0xff]
  %v418 = vld [vmem:[%s414 + $0x18] sm:$0xff]
  %v419 = vld [vmem:[%s414 + $0x20] sm:$0xff]
  %v420 = vld [vmem:[%s414 + $0x28] sm:$0xff]
  %v421 = vld [vmem:[%s414 + $0x30] sm:$0xff]
  %v422 = vld [vmem:[%s414 + $0x38] sm:$0xff]
  %v423 = vld [vmem:[%s414 + $0x40] sm:$0xff]
  %v424 = vld [vmem:[%s414 + $0x48] sm:$0xff]
  %v425 = vld [vmem:[%s414 + $0x50] sm:$0xff]
  %v426 = vld [vmem:[%s414 + $0x58] sm:$0xff]
  %v427 = vld [vmem:[%s414 + $0x60] sm:$0xff]
  %v428 = vld [vmem:[%s414 + $0x68] sm:$0xff]
  %v429 = vld [vmem:[%s414 + $0x70] sm:$0xff]
  %v430 = vld [vmem:[%s414 + $0x78] sm:$0xff]
  %v431 = vld [vmem:[%s414 + $0x80] sm:$0xff]
  %v432 = vld [vmem:[%s414 + $0x88] sm:$0xff]
  %433 = vmatprep.subr.mxu0 %v416
  %434 = vmatpush1.msra.mxu0 %v415
  %435 = vmatprep.subr.mxu0 %v418
  %436 = vmatpush1.msra.mxu0 %v417
  %437 = vmatprep.subr.mxu0 %v420
  %438 = vmatpush1.msra.mxu0 %v419
  %439 = vmatprep.subr.mxu0 %v422
  %440 = vmatpush1.msra.mxu0 %v421
  %441 = vmatprep.subr.mxu0 %v424
  %442 = vmatpush1.msra.mxu0 %v423
  %443 = vmatprep.subr.mxu0 %v426
  %444 = vmatpush1.msra.mxu0 %v425
  %445 = vmatprep.subr.mxu0 %v428
  %446 = vmatpush1.msra.mxu0 %v427
  %447 = vmatprep.subr.mxu0 %v430
  %448 = vmatpush1.msra.mxu0 %v429
  %449 = vmatprep.subr.mxu0 %v432
  %450 = vmatpush1.msra.mxu0 %v431
  %451 = vmatprep.subr.mxu0 0.0
  %452 = vmatpush1.msra.mxu0 0.0
  %453 = vmatprep.subr.mxu0 0.0
  %454 = vmatpush1.msra.mxu0 0.0
  %455 = vmatprep.subr.mxu0 0.0
  %456 = vmatpush1.msra.mxu0 0.0
  %457 = vmatprep.subr.mxu0 0.0
  %458 = vmatpush1.msra.mxu0 0.0
  %459 = vmatprep.subr.mxu0 0.0
  %460 = vmatpush1.msra.mxu0 0.0
  %461 = vmatprep.subr.mxu0 0.0
  %462 = vmatpush1.msra.mxu0 0.0
  %463 = vmatprep.subr.mxu0 0.0
  %464 = vmatpush1.msra.mxu0 0.0
  %465 = vmatprep.subr.mxu0 0.0
  %466 = vmatpush1.msra.mxu0 0.0
  %467 = vmatprep.subr.mxu0 0.0
  %468 = vmatpush1.msra.mxu0 0.0
  %469 = vmatprep.subr.mxu0 0.0
  %470 = vmatpush1.msra.mxu0 0.0
  %471 = vmatprep.subr.mxu0 0.0
  %472 = vmatpush1.msra.mxu0 0.0
  %473 = vmatprep.subr.mxu0 0.0
  %474 = vmatpush1.msra.mxu0 0.0
  %475 = vmatprep.subr.mxu0 0.0
  %476 = vmatpush1.msra.mxu0 0.0
  %477 = vmatprep.subr.mxu0 0.0
  %478 = vmatpush1.msra.mxu0 0.0
  %479 = vmatprep.subr.mxu0 0.0
  %480 = vmatpush1.msra.mxu0 0.0
  %481 = vmatprep.subr.mxu0 0.0
  %482 = vmatpush1.msra.mxu0 0.0
  %483 = vmatprep.subr.mxu0 0.0
  %484 = vmatpush1.msra.mxu0 0.0
  %485 = vmatprep.subr.mxu0 0.0
  %486 = vmatpush1.msra.mxu0 0.0
  %487 = vmatprep.subr.mxu0 0.0
  %488 = vmatpush1.msra.mxu0 0.0
  %489 = vmatprep.subr.mxu0 0.0
  %490 = vmatpush1.msra.mxu0 0.0
  %491 = vmatprep.subr.mxu0 0.0
  %492 = vmatpush1.msra.mxu0 0.0
  %493 = vmatprep.subr.mxu0 0.0
  %494 = vmatpush1.msra.mxu0 0.0
  %495 = vmatprep.subr.mxu0 0.0
  %496 = vmatpush1.msra.mxu0 0.0
  %497 = vmatprep.mubr.f32.mxu0 0.0
  %498 = vmatmul.mubr.f32.gmra.mrb[0].mxu0 %v89
  %v499 = vpop.f32.mrb[0].mxu0
  %v500 = vadd.f32 0.0, %v499
  %v501 = vpop.f32.mrb[0].mxu0
  %v502 = vadd.f32 0.0, %v501
  %503 = vmatprep.mubr.f32.mxu0 0.0
  %504 = vmatmul.mubr.f32.gmra.mrb[0].mxu0 %v92
  %v505 = vpop.f32.mrb[0].mxu0
  %v506 = vadd.f32 0.0, %v505
  %v507 = vpop.f32.mrb[0].mxu0
  %v508 = vadd.f32 0.0, %v507
  %509 = vdwg.mxu0
  %510 = vmatprep.subr.mxu0 %v51
  %511 = vmatpush1.msra.mxu0 %v50
  %512 = vmatprep.subr.mxu0 %v53
  %513 = vmatpush1.msra.mxu0 %v52
  %514 = vmatprep.subr.mxu0 %v55
  %515 = vmatpush1.msra.mxu0 %v54
  %516 = vmatprep.subr.mxu0 %v57
  %517 = vmatpush1.msra.mxu0 %v56
  %518 = vmatprep.subr.mxu0 %v59
  %519 = vmatpush1.msra.mxu0 %v58
  %520 = vmatprep.subr.mxu0 %v61
  %521 = vmatpush1.msra.mxu0 %v60
  %522 = vmatprep.subr.mxu0 %v63
  %523 = vmatpush1.msra.mxu0 %v62
  %524 = vmatprep.subr.mxu0 %v65
  %525 = vmatpush1.msra.mxu0 %v64
  %526 = vmatprep.subr.mxu0 %v67
  %527 = vmatpush1.msra.mxu0 %v66
  %528 = vmatprep.subr.mxu0 0.0
  %529 = vmatpush1.msra.mxu0 0.0
  %530 = vmatprep.subr.mxu0 0.0
  %531 = vmatpush1.msra.mxu0 0.0
  %532 = vmatprep.subr.mxu0 0.0
  %533 = vmatpush1.msra.mxu0 0.0
  %534 = vmatprep.subr.mxu0 0.0
  %535 = vmatpush1.msra.mxu0 0.0
  %536 = vmatprep.subr.mxu0 0.0
  %537 = vmatpush1.msra.mxu0 0.0
  %538 = vmatprep.subr.mxu0 0.0
  %539 = vmatpush1.msra.mxu0 0.0
  %540 = vmatprep.subr.mxu0 0.0
  %541 = vmatpush1.msra.mxu0 0.0
  %542 = vmatprep.subr.mxu0 0.0
  %543 = vmatpush1.msra.mxu0 0.0
  %544 = vmatprep.subr.mxu0 0.0
  %545 = vmatpush1.msra.mxu0 0.0
  %546 = vmatprep.subr.mxu0 0.0
  %547 = vmatpush1.msra.mxu0 0.0
  %548 = vmatprep.subr.mxu0 0.0
  %549 = vmatpush1.msra.mxu0 0.0
  %550 = vmatprep.subr.mxu0 0.0
  %551 = vmatpush1.msra.mxu0 0.0
  %552 = vmatprep.subr.mxu0 0.0
  %553 = vmatpush1.msra.mxu0 0.0
  %554 = vmatprep.subr.mxu0 0.0
  %555 = vmatpush1.msra.mxu0 0.0
  %556 = vmatprep.subr.mxu0 0.0
  %557 = vmatpush1.msra.mxu0 0.0
  %558 = vmatprep.subr.mxu0 0.0
  %559 = vmatpush1.msra.mxu0 0.0
  %560 = vmatprep.subr.mxu0 0.0
  %561 = vmatpush1.msra.mxu0 0.0
  %562 = vmatprep.subr.mxu0 0.0
  %563 = vmatpush1.msra.mxu0 0.0
  %564 = vmatprep.subr.mxu0 0.0
  %565 = vmatpush1.msra.mxu0 0.0
  %566 = vmatprep.subr.mxu0 0.0
  %567 = vmatpush1.msra.mxu0 0.0
  %568 = vmatprep.subr.mxu0 0.0
  %569 = vmatpush1.msra.mxu0 0.0
  %570 = vmatprep.subr.mxu0 0.0
  %571 = vmatpush1.msra.mxu0 0.0
  %572 = vmatprep.subr.mxu0 0.0
  %573 = vmatpush1.msra.mxu0 0.0
  %574 = vmatprep.mubr.f32.mxu0 0.0
  %575 = vmatmul.mubr.f32.gmra.mrb[0].mxu0 %v172
  %v576 = vpop.f32.mrb[0].mxu0
  %v577 = vadd.f32 %v500, %v576
  %v578 = vpop.f32.mrb[0].mxu0
  %v579 = vadd.f32 %v502, %v578
  %580 = vmatprep.mubr.f32.mxu0 0.0
  %581 = vmatmul.mubr.f32.gmra.mrb[0].mxu0 %v175
  %v582 = vpop.f32.mrb[0].mxu0
  %v583 = vadd.f32 %v506, %v582
  %v584 = vpop.f32.mrb[0].mxu0
  %v585 = vadd.f32 %v508, %v584
  %586 = vdwg.mxu0
  %587 = vmatprep.subr.mxu0 %v416
  %588 = vmatpush1.msra.mxu0 %v415
  %589 = vmatprep.subr.mxu0 %v418
  %590 = vmatpush1.msra.mxu0 %v417
  %591 = vmatprep.subr.mxu0 %v420
  %592 = vmatpush1.msra.mxu0 %v419
  %593 = vmatprep.subr.mxu0 %v422
  %594 = vmatpush1.msra.mxu0 %v421
  %595 = vmatprep.subr.mxu0 %v424
  %596 = vmatpush1.msra.mxu0 %v423
  %597 = vmatprep.subr.mxu0 %v426
  %598 = vmatpush1.msra.mxu0 %v425
  %599 = vmatprep.subr.mxu0 %v428
  %600 = vmatpush1.msra.mxu0 %v427
  %601 = vmatprep.subr.mxu0 %v430
  %602 = vmatpush1.msra.mxu0 %v429
  %603 = vmatprep.subr.mxu0 %v432
  %604 = vmatpush1.msra.mxu0 %v431
  %605 = vmatprep.subr.mxu0 0.0
  %606 = vmatpush1.msra.mxu0 0.0
  %607 = vmatprep.subr.mxu0 0.0
  %608 = vmatpush1.msra.mxu0 0.0
  %609 = vmatprep.subr.mxu0 0.0
  %610 = vmatpush1.msra.mxu0 0.0
  %611 = vmatprep.subr.mxu0 0.0
  %612 = vmatpush1.msra.mxu0 0.0
  %613 = vmatprep.subr.mxu0 0.0
  %614 = vmatpush1.msra.mxu0 0.0
  %615 = vmatprep.subr.mxu0 0.0
  %616 = vmatpush1.msra.mxu0 0.0
  %617 = vmatprep.subr.mxu0 0.0
  %618 = vmatpush1.msra.mxu0 0.0
  %619 = vmatprep.subr.mxu0 0.0
  %620 = vmatpush1.msra.mxu0 0.0
  %621 = vmatprep.subr.mxu0 0.0
  %622 = vmatpush1.msra.mxu0 0.0
  %623 = vmatprep.subr.mxu0 0.0
  %624 = vmatpush1.msra.mxu0 0.0
  %625 = vmatprep.subr.mxu0 0.0
  %626 = vmatpush1.msra.mxu0 0.0
  %627 = vmatprep.subr.mxu0 0.0
  %628 = vmatpush1.msra.mxu0 0.0
  %629 = vmatprep.subr.mxu0 0.0
  %630 = vmatpush1.msra.mxu0 0.0
  %631 = vmatprep.subr.mxu0 0.0
  %632 = vmatpush1.msra.mxu0 0.0
  %633 = vmatprep.subr.mxu0 0.0
  %634 = vmatpush1.msra.mxu0 0.0
  %635 = vmatprep.subr.mxu0 0.0
  %636 = vmatpush1.msra.mxu0 0.0
  %637 = vmatprep.subr.mxu0 0.0
  %638 = vmatpush1.msra.mxu0 0.0
  %639 = vmatprep.subr.mxu0 0.0
  %640 = vmatpush1.msra.mxu0 0.0
  %641 = vmatprep.subr.mxu0 0.0
  %642 = vmatpush1.msra.mxu0 0.0
  %643 = vmatprep.subr.mxu0 0.0
  %644 = vmatpush1.msra.mxu0 0.0
  %645 = vmatprep.subr.mxu0 0.0
  %646 = vmatpush1.msra.mxu0 0.0
  %647 = vmatprep.subr.mxu0 0.0
  %648 = vmatpush1.msra.mxu0 0.0
  %649 = vmatprep.subr.mxu0 0.0
  %650 = vmatpush1.msra.mxu0 0.0
  %651 = vmatprep.mubr.f32.mxu0 0.0
  %652 = vmatmul.mubr.f32.gmra.mrb[0].mxu0 %v255
  %v653 = vpop.f32.mrb[0].mxu0
  %v654 = vadd.f32 0.0, %v653
  %v655 = vpop.f32.mrb[0].mxu0
  %v656 = vadd.f32 0.0, %v655
  %657 = vmatprep.mubr.f32.mxu0 0.0
  %658 = vmatmul.mubr.f32.gmra.mrb[0].mxu0 %v258
  %v659 = vpop.f32.mrb[0].mxu0
  %v660 = vadd.f32 0.0, %v659
  %v661 = vpop.f32.mrb[0].mxu0
  %v662 = vadd.f32 0.0, %v661
  %663 = vdwg.mxu0
  %664 = vmatprep.subr.mxu0 %v51
  %665 = vmatpush1.msra.mxu0 %v50
  %666 = vmatprep.subr.mxu0 %v53
  %667 = vmatpush1.msra.mxu0 %v52
  %668 = vmatprep.subr.mxu0 %v55
  %669 = vmatpush1.msra.mxu0 %v54
  %670 = vmatprep.subr.mxu0 %v57
  %671 = vmatpush1.msra.mxu0 %v56
  %672 = vmatprep.subr.mxu0 %v59
  %673 = vmatpush1.msra.mxu0 %v58
  %674 = vmatprep.subr.mxu0 %v61
  %675 = vmatpush1.msra.mxu0 %v60
  %676 = vmatprep.subr.mxu0 %v63
  %677 = vmatpush1.msra.mxu0 %v62
  %678 = vmatprep.subr.mxu0 %v65
  %679 = vmatpush1.msra.mxu0 %v64
  %680 = vmatprep.subr.mxu0 %v67
  %681 = vmatpush1.msra.mxu0 %v66
  %682 = vmatprep.subr.mxu0 0.0
  %683 = vmatpush1.msra.mxu0 0.0
  %684 = vmatprep.subr.mxu0 0.0
  %685 = vmatpush1.msra.mxu0 0.0
  %686 = vmatprep.subr.mxu0 0.0
  %687 = vmatpush1.msra.mxu0 0.0
  %688 = vmatprep.subr.mxu0 0.0
  %689 = vmatpush1.msra.mxu0 0.0
  %690 = vmatprep.subr.mxu0 0.0
  %691 = vmatpush1.msra.mxu0 0.0
  %692 = vmatprep.subr.mxu0 0.0
  %693 = vmatpush1.msra.mxu0 0.0
  %694 = vmatprep.subr.mxu0 0.0
  %695 = vmatpush1.msra.mxu0 0.0
  %696 = vmatprep.subr.mxu0 0.0
  %697 = vmatpush1.msra.mxu0 0.0
  %698 = vmatprep.subr.mxu0 0.0
  %699 = vmatpush1.msra.mxu0 0.0
  %700 = vmatprep.subr.mxu0 0.0
  %701 = vmatpush1.msra.mxu0 0.0
  %702 = vmatprep.subr.mxu0 0.0
  %703 = vmatpush1.msra.mxu0 0.0
  %704 = vmatprep.subr.mxu0 0.0
  %705 = vmatpush1.msra.mxu0 0.0
  %706 = vmatprep.subr.mxu0 0.0
  %707 = vmatpush1.msra.mxu0 0.0
  %708 = vmatprep.subr.mxu0 0.0
  %709 = vmatpush1.msra.mxu0 0.0
  %710 = vmatprep.subr.mxu0 0.0
  %711 = vmatpush1.msra.mxu0 0.0
  %712 = vmatprep.subr.mxu0 0.0
  %713 = vmatpush1.msra.mxu0 0.0
  %714 = vmatprep.subr.mxu0 0.0
  %715 = vmatpush1.msra.mxu0 0.0
  %716 = vmatprep.subr.mxu0 0.0
  %717 = vmatpush1.msra.mxu0 0.0
  %718 = vmatprep.subr.mxu0 0.0
  %719 = vmatpush1.msra.mxu0 0.0
  %720 = vmatprep.subr.mxu0 0.0
  %721 = vmatpush1.msra.mxu0 0.0
  %722 = vmatprep.subr.mxu0 0.0
  %723 = vmatpush1.msra.mxu0 0.0
  %724 = vmatprep.subr.mxu0 0.0
  %725 = vmatpush1.msra.mxu0 0.0
  %726 = vmatprep.subr.mxu0 0.0
  %727 = vmatpush1.msra.mxu0 0.0
  %728 = vmatprep.mubr.f32.mxu0 0.0
  %729 = vmatmul.mubr.f32.gmra.mrb[0].mxu0 %v89
  %v730 = vpop.f32.mrb[0].mxu0
  %v731 = vadd.f32 %v654, %v730
  %v732 = vpop.f32.mrb[0].mxu0
  %v733 = vadd.f32 %v656, %v732
  %734 = vmatprep.mubr.f32.mxu0 0.0
  %735 = vmatmul.mubr.f32.gmra.mrb[0].mxu0 %v92
  %v736 = vpop.f32.mrb[0].mxu0
  %v737 = vadd.f32 %v660, %v736
  %v738 = vpop.f32.mrb[0].mxu0
  %v739 = vadd.f32 %v662, %v738
  %740 = vdwg.mxu0
  %s741 = scalar_lea.vmem %s1, 576
  %v742 = vld [vmem:[%s741] sm:$0xff]
  %v743 = vld [vmem:[%s741 + $0x8] sm:$0xff]
  %v744 = vld [vmem:[%s741 + $0x10] sm:$0xff]
  %v745 = vld [vmem:[%s741 + $0x18] sm:$0xff]
  %v746 = vld [vmem:[%s741 + $0x20] sm:$0xff]
  %v747 = vld [vmem:[%s741 + $0x28] sm:$0xff]
  %v748 = vld [vmem:[%s741 + $0x30] sm:$0xff]
  %v749 = vld [vmem:[%s741 + $0x38] sm:$0xff]
  %v750 = vld [vmem:[%s741 + $0x40] sm:$0xff]
  %v751 = vld [vmem:[%s741 + $0x48] sm:$0xff]
  %v752 = vld [vmem:[%s741 + $0x50] sm:$0xff]
  %v753 = vld [vmem:[%s741 + $0x58] sm:$0xff]
  %v754 = vld [vmem:[%s741 + $0x60] sm:$0xff]
  %v755 = vld [vmem:[%s741 + $0x68] sm:$0xff]
  %v756 = vld [vmem:[%s741 + $0x70] sm:$0xff]
  %v757 = vld [vmem:[%s741 + $0x78] sm:$0xff]
  %v758 = vld [vmem:[%s741 + $0x80] sm:$0xff]
  %v759 = vld [vmem:[%s741 + $0x88] sm:$0xff]
  %760 = vmatprep.subr.mxu0 %v743
  %761 = vmatpush1.msra.mxu0 %v742
  %762 = vmatprep.subr.mxu0 %v745
  %763 = vmatpush1.msra.mxu0 %v744
  %764 = vmatprep.subr.mxu0 %v747
  %765 = vmatpush1.msra.mxu0 %v746
  %766 = vmatprep.subr.mxu0 %v749
  %767 = vmatpush1.msra.mxu0 %v748
  %768 = vmatprep.subr.mxu0 %v751
  %769 = vmatpush1.msra.mxu0 %v750
  %770 = vmatprep.subr.mxu0 %v753
  %771 = vmatpush1.msra.mxu0 %v752
  %772 = vmatprep.subr.mxu0 %v755
  %773 = vmatpush1.msra.mxu0 %v754
  %774 = vmatprep.subr.mxu0 %v757
  %775 = vmatpush1.msra.mxu0 %v756
  %776 = vmatprep.subr.mxu0 %v759
  %777 = vmatpush1.msra.mxu0 %v758
  %778 = vmatprep.subr.mxu0 0.0
  %779 = vmatpush1.msra.mxu0 0.0
  %780 = vmatprep.subr.mxu0 0.0
  %781 = vmatpush1.msra.mxu0 0.0
  %782 = vmatprep.subr.mxu0 0.0
  %783 = vmatpush1.msra.mxu0 0.0
  %784 = vmatprep.subr.mxu0 0.0
  %785 = vmatpush1.msra.mxu0 0.0
  %786 = vmatprep.subr.mxu0 0.0
  %787 = vmatpush1.msra.mxu0 0.0
  %788 = vmatprep.subr.mxu0 0.0
  %789 = vmatpush1.msra.mxu0 0.0
  %790 = vmatprep.subr.mxu0 0.0
  %791 = vmatpush1.msra.mxu0 0.0
  %792 = vmatprep.subr.mxu0 0.0
  %793 = vmatpush1.msra.mxu0 0.0
  %794 = vmatprep.subr.mxu0 0.0
  %795 = vmatpush1.msra.mxu0 0.0
  %796 = vmatprep.subr.mxu0 0.0
  %797 = vmatpush1.msra.mxu0 0.0
  %798 = vmatprep.subr.mxu0 0.0
  %799 = vmatpush1.msra.mxu0 0.0
  %800 = vmatprep.subr.mxu0 0.0
  %801 = vmatpush1.msra.mxu0 0.0
  %802 = vmatprep.subr.mxu0 0.0
  %803 = vmatpush1.msra.mxu0 0.0
  %804 = vmatprep.subr.mxu0 0.0
  %805 = vmatpush1.msra.mxu0 0.0
  %806 = vmatprep.subr.mxu0 0.0
  %807 = vmatpush1.msra.mxu0 0.0
  %808 = vmatprep.subr.mxu0 0.0
  %809 = vmatpush1.msra.mxu0 0.0
  %810 = vmatprep.subr.mxu0 0.0
  %811 = vmatpush1.msra.mxu0 0.0
  %812 = vmatprep.subr.mxu0 0.0
  %813 = vmatpush1.msra.mxu0 0.0
  %814 = vmatprep.subr.mxu0 0.0
  %815 = vmatpush1.msra.mxu0 0.0
  %816 = vmatprep.subr.mxu0 0.0
  %817 = vmatpush1.msra.mxu0 0.0
  %818 = vmatprep.subr.mxu0 0.0
  %819 = vmatpush1.msra.mxu0 0.0
  %820 = vmatprep.subr.mxu0 0.0
  %821 = vmatpush1.msra.mxu0 0.0
  %822 = vmatprep.subr.mxu0 0.0
  %823 = vmatpush1.msra.mxu0 0.0
  %824 = vmatprep.mubr.f32.mxu0 0.0
  %825 = vmatmul.mubr.f32.gmra.mrb[0].mxu0 %v255
  %v826 = vpop.f32.mrb[0].mxu0
  %v827 = vadd.f32 0.0, %v826
  %v828 = vpop.f32.mrb[0].mxu0
  %v829 = vadd.f32 0.0, %v828
  %830 = vmatprep.mubr.f32.mxu0 0.0
  %831 = vmatmul.mubr.f32.gmra.mrb[0].mxu0 %v258
  %v832 = vpop.f32.mrb[0].mxu0
  %v833 = vadd.f32 0.0, %v832
  %v834 = vpop.f32.mrb[0].mxu0
  %v835 = vadd.f32 0.0, %v834
  %836 = vdwg.mxu0
  %v837 = vadd.f32 %v244, %v827
  %v838 = vadd.f32 %v246, %v829
  %v839 = vadd.f32 %v250, %v833
  %v840 = vadd.f32 %v252, %v835
  %v842 = vsel %vm87, %v29, 0
  %v845 = vsel %vm87, %v30, 0
  %847 = vmatprep.subr.mxu0 %v743
  %848 = vmatpush1.msra.mxu0 %v742
  %849 = vmatprep.subr.mxu0 %v745
  %850 = vmatpush1.msra.mxu0 %v744
  %851 = vmatprep.subr.mxu0 %v747
  %852 = vmatpush1.msra.mxu0 %v746
  %853 = vmatprep.subr.mxu0 %v749
  %854 = vmatpush1.msra.mxu0 %v748
  %855 = vmatprep.subr.mxu0 %v751
  %856 = vmatpush1.msra.mxu0 %v750
  %857 = vmatprep.subr.mxu0 %v753
  %858 = vmatpush1.msra.mxu0 %v752
  %859 = vmatprep.subr.mxu0 %v755
  %860 = vmatpush1.msra.mxu0 %v754
  %861 = vmatprep.subr.mxu0 %v757
  %862 = vmatpush1.msra.mxu0 %v756
  %863 = vmatprep.subr.mxu0 %v759
  %864 = vmatpush1.msra.mxu0 %v758
  %865 = vmatprep.subr.mxu0 0.0
  %866 = vmatpush1.msra.mxu0 0.0
  %867 = vmatprep.subr.mxu0 0.0
  %868 = vmatpush1.msra.mxu0 0.0
  %869 = vmatprep.subr.mxu0 0.0
  %870 = vmatpush1.msra.mxu0 0.0
  %871 = vmatprep.subr.mxu0 0.0
  %872 = vmatpush1.msra.mxu0 0.0
  %873 = vmatprep.subr.mxu0 0.0
  %874 = vmatpush1.msra.mxu0 0.0
  %875 = vmatprep.subr.mxu0 0.0
  %876 = vmatpush1.msra.mxu0 0.0
  %877 = vmatprep.subr.mxu0 0.0
  %878 = vmatpush1.msra.mxu0 0.0
  %879 = vmatprep.subr.mxu0 0.0
  %880 = vmatpush1.msra.mxu0 0.0
  %881 = vmatprep.subr.mxu0 0.0
  %882 = vmatpush1.msra.mxu0 0.0
  %883 = vmatprep.subr.mxu0 0.0
  %884 = vmatpush1.msra.mxu0 0.0
  %885 = vmatprep.subr.mxu0 0.0
  %886 = vmatpush1.msra.mxu0 0.0
  %887 = vmatprep.subr.mxu0 0.0
  %888 = vmatpush1.msra.mxu0 0.0
  %889 = vmatprep.subr.mxu0 0.0
  %890 = vmatpush1.msra.mxu0 0.0
  %891 = vmatprep.subr.mxu0 0.0
  %892 = vmatpush1.msra.mxu0 0.0
  %893 = vmatprep.subr.mxu0 0.0
  %894 = vmatpush1.msra.mxu0 0.0
  %895 = vmatprep.subr.mxu0 0.0
  %896 = vmatpush1.msra.mxu0 0.0
  %897 = vmatprep.subr.mxu0 0.0
  %898 = vmatpush1.msra.mxu0 0.0
  %899 = vmatprep.subr.mxu0 0.0
  %900 = vmatpush1.msra.mxu0 0.0
  %901 = vmatprep.subr.mxu0 0.0
  %902 = vmatpush1.msra.mxu0 0.0
  %903 = vmatprep.subr.mxu0 0.0
  %904 = vmatpush1.msra.mxu0 0.0
  %905 = vmatprep.subr.mxu0 0.0
  %906 = vmatpush1.msra.mxu0 0.0
  %907 = vmatprep.subr.mxu0 0.0
  %908 = vmatpush1.msra.mxu0 0.0
  %909 = vmatprep.subr.mxu0 0.0
  %910 = vmatpush1.msra.mxu0 0.0
  %911 = vmatprep.mubr.f32.mxu0 0.0
  %912 = vmatmul.mubr.f32.gmra.mrb[0].mxu0 %v842
  %v913 = vpop.f32.mrb[0].mxu0
  %v914 = vadd.f32 0.0, %v913
  %v915 = vpop.f32.mrb[0].mxu0
  %v916 = vadd.f32 0.0, %v915
  %917 = vmatprep.mubr.f32.mxu0 0.0
  %918 = vmatmul.mubr.f32.gmra.mrb[0].mxu0 %v845
  %v919 = vpop.f32.mrb[0].mxu0
  %v920 = vadd.f32 0.0, %v919
  %v921 = vpop.f32.mrb[0].mxu0
  %v922 = vadd.f32 0.0, %v921
  %923 = vdwg.mxu0
  %v924 = vadd.f32 %v404, %v914
  %v925 = vadd.f32 %v406, %v916
  %v926 = vadd.f32 %v410, %v920
  %v927 = vadd.f32 %v412, %v922
  %s928 = scalar_lea.vmem %s1, 720
  %v929 = vld [vmem:[%s928] sm:$0xff]
  %v930 = vld [vmem:[%s928 + $0x8] sm:$0xff]
  %v931 = vld [vmem:[%s928 + $0x10] sm:$0xff]
  %v932 = vld [vmem:[%s928 + $0x18] sm:$0xff]
  %v933 = vld [vmem:[%s928 + $0x20] sm:$0xff]
  %v934 = vld [vmem:[%s928 + $0x28] sm:$0xff]
  %v935 = vld [vmem:[%s928 + $0x30] sm:$0xff]
  %v936 = vld [vmem:[%s928 + $0x38] sm:$0xff]
  %v937 = vld [vmem:[%s928 + $0x40] sm:$0xff]
  %v938 = vld [vmem:[%s928 + $0x48] sm:$0xff]
  %v939 = vld [vmem:[%s928 + $0x50] sm:$0xff]
  %v940 = vld [vmem:[%s928 + $0x58] sm:$0xff]
  %v941 = vld [vmem:[%s928 + $0x60] sm:$0xff]
  %v942 = vld [vmem:[%s928 + $0x68] sm:$0xff]
  %v943 = vld [vmem:[%s928 + $0x70] sm:$0xff]
  %v944 = vld [vmem:[%s928 + $0x78] sm:$0xff]
  %v945 = vld [vmem:[%s928 + $0x80] sm:$0xff]
  %v946 = vld [vmem:[%s928 + $0x88] sm:$0xff]
  %947 = vmatprep.subr.mxu0 %v930
  %948 = vmatpush1.msra.mxu0 %v929
  %949 = vmatprep.subr.mxu0 %v932
  %950 = vmatpush1.msra.mxu0 %v931
  %951 = vmatprep.subr.mxu0 %v934
  %952 = vmatpush1.msra.mxu0 %v933
  %953 = vmatprep.subr.mxu0 %v936
  %954 = vmatpush1.msra.mxu0 %v935
  %955 = vmatprep.subr.mxu0 %v938
  %956 = vmatpush1.msra.mxu0 %v937
  %957 = vmatprep.subr.mxu0 %v940
  %958 = vmatpush1.msra.mxu0 %v939
  %959 = vmatprep.subr.mxu0 %v942
  %960 = vmatpush1.msra.mxu0 %v941
  %961 = vmatprep.subr.mxu0 %v944
  %962 = vmatpush1.msra.mxu0 %v943
  %963 = vmatprep.subr.mxu0 %v946
  %964 = vmatpush1.msra.mxu0 %v945
  %965 = vmatprep.subr.mxu0 0.0
  %966 = vmatpush1.msra.mxu0 0.0
  %967 = vmatprep.subr.mxu0 0.0
  %968 = vmatpush1.msra.mxu0 0.0
  %969 = vmatprep.subr.mxu0 0.0
  %970 = vmatpush1.msra.mxu0 0.0
  %971 = vmatprep.subr.mxu0 0.0
  %972 = vmatpush1.msra.mxu0 0.0
  %973 = vmatprep.subr.mxu0 0.0
  %974 = vmatpush1.msra.mxu0 0.0
  %975 = vmatprep.subr.mxu0 0.0
  %976 = vmatpush1.msra.mxu0 0.0
  %977 = vmatprep.subr.mxu0 0.0
  %978 = vmatpush1.msra.mxu0 0.0
  %979 = vmatprep.subr.mxu0 0.0
  %980 = vmatpush1.msra.mxu0 0.0
  %981 = vmatprep.subr.mxu0 0.0
  %982 = vmatpush1.msra.mxu0 0.0
  %983 = vmatprep.subr.mxu0 0.0
  %984 = vmatpush1.msra.mxu0 0.0
  %985 = vmatprep.subr.mxu0 0.0
  %986 = vmatpush1.msra.mxu0 0.0
  %987 = vmatprep.subr.mxu0 0.0
  %988 = vmatpush1.msra.mxu0 0.0
  %989 = vmatprep.subr.mxu0 0.0
  %990 = vmatpush1.msra.mxu0 0.0
  %991 = vmatprep.subr.mxu0 0.0
  %992 = vmatpush1.msra.mxu0 0.0
  %993 = vmatprep.subr.mxu0 0.0
  %994 = vmatpush1.msra.mxu0 0.0
  %995 = vmatprep.subr.mxu0 0.0
  %996 = vmatpush1.msra.mxu0 0.0
  %997 = vmatprep.subr.mxu0 0.0
  %998 = vmatpush1.msra.mxu0 0.0
  %999 = vmatprep.subr.mxu0 0.0
  %1000 = vmatpush1.msra.mxu0 0.0
  %1001 = vmatprep.subr.mxu0 0.0
  %1002 = vmatpush1.msra.mxu0 0.0
  %1003 = vmatprep.subr.mxu0 0.0
  %1004 = vmatpush1.msra.mxu0 0.0
  %1005 = vmatprep.subr.mxu0 0.0
  %1006 = vmatpush1.msra.mxu0 0.0
  %1007 = vmatprep.subr.mxu0 0.0
  %1008 = vmatpush1.msra.mxu0 0.0
  %1009 = vmatprep.subr.mxu0 0.0
  %1010 = vmatpush1.msra.mxu0 0.0
  %1011 = vmatprep.mubr.f32.mxu0 0.0
  %1012 = vmatmul.mubr.f32.gmra.mrb[0].mxu0 %v255
  %v1013 = vpop.f32.mrb[0].mxu0
  %v1014 = vadd.f32 0.0, %v1013
  %v1015 = vpop.f32.mrb[0].mxu0
  %v1016 = vadd.f32 0.0, %v1015
  %1017 = vmatprep.mubr.f32.mxu0 0.0
  %1018 = vmatmul.mubr.f32.gmra.mrb[0].mxu0 %v258
  %v1019 = vpop.f32.mrb[0].mxu0
  %v1020 = vadd.f32 0.0, %v1019
  %v1021 = vpop.f32.mrb[0].mxu0
  %v1022 = vadd.f32 0.0, %v1021
  %1023 = vdwg.mxu0
  %v1024 = vadd.f32 %v577, %v1014
  %v1025 = vadd.f32 %v579, %v1016
  %v1026 = vadd.f32 %v583, %v1020
  %v1027 = vadd.f32 %v585, %v1022
  %1028 = vmatprep.subr.mxu0 %v930
  %1029 = vmatpush1.msra.mxu0 %v929
  %1030 = vmatprep.subr.mxu0 %v932
  %1031 = vmatpush1.msra.mxu0 %v931
  %1032 = vmatprep.subr.mxu0 %v934
  %1033 = vmatpush1.msra.mxu0 %v933
  %1034 = vmatprep.subr.mxu0 %v936
  %1035 = vmatpush1.msra.mxu0 %v935
  %1036 = vmatprep.subr.mxu0 %v938
  %1037 = vmatpush1.msra.mxu0 %v937
  %1038 = vmatprep.subr.mxu0 %v940
  %1039 = vmatpush1.msra.mxu0 %v939
  %1040 = vmatprep.subr.mxu0 %v942
  %1041 = vmatpush1.msra.mxu0 %v941
  %1042 = vmatprep.subr.mxu0 %v944
  %1043 = vmatpush1.msra.mxu0 %v943
  %1044 = vmatprep.subr.mxu0 %v946
  %1045 = vmatpush1.msra.mxu0 %v945
  %1046 = vmatprep.subr.mxu0 0.0
  %1047 = vmatpush1.msra.mxu0 0.0
  %1048 = vmatprep.subr.mxu0 0.0
  %1049 = vmatpush1.msra.mxu0 0.0
  %1050 = vmatprep.subr.mxu0 0.0
  %1051 = vmatpush1.msra.mxu0 0.0
  %1052 = vmatprep.subr.mxu0 0.0
  %1053 = vmatpush1.msra.mxu0 0.0
  %1054 = vmatprep.subr.mxu0 0.0
  %1055 = vmatpush1.msra.mxu0 0.0
  %1056 = vmatprep.subr.mxu0 0.0
  %1057 = vmatpush1.msra.mxu0 0.0
  %1058 = vmatprep.subr.mxu0 0.0
  %1059 = vmatpush1.msra.mxu0 0.0
  %1060 = vmatprep.subr.mxu0 0.0
  %1061 = vmatpush1.msra.mxu0 0.0
  %1062 = vmatprep.subr.mxu0 0.0
  %1063 = vmatpush1.msra.mxu0 0.0
  %1064 = vmatprep.subr.mxu0 0.0
  %1065 = vmatpush1.msra.mxu0 0.0
  %1066 = vmatprep.subr.mxu0 0.0
  %1067 = vmatpush1.msra.mxu0 0.0
  %1068 = vmatprep.subr.mxu0 0.0
  %1069 = vmatpush1.msra.mxu0 0.0
  %1070 = vmatprep.subr.mxu0 0.0
  %1071 = vmatpush1.msra.mxu0 0.0
  %1072 = vmatprep.subr.mxu0 0.0
  %1073 = vmatpush1.msra.mxu0 0.0
  %1074 = vmatprep.subr.mxu0 0.0
  %1075 = vmatpush1.msra.mxu0 0.0
  %1076 = vmatprep.subr.mxu0 0.0
  %1077 = vmatpush1.msra.mxu0 0.0
  %1078 = vmatprep.subr.mxu0 0.0
  %1079 = vmatpush1.msra.mxu0 0.0
  %1080 = vmatprep.subr.mxu0 0.0
  %1081 = vmatpush1.msra.mxu0 0.0
  %1082 = vmatprep.subr.mxu0 0.0
  %1083 = vmatpush1.msra.mxu0 0.0
  %1084 = vmatprep.subr.mxu0 0.0
  %1085 = vmatpush1.msra.mxu0 0.0
  %1086 = vmatprep.subr.mxu0 0.0
  %1087 = vmatpush1.msra.mxu0 0.0
  %1088 = vmatprep.subr.mxu0 0.0
  %1089 = vmatpush1.msra.mxu0 0.0
  %1090 = vmatprep.subr.mxu0 0.0
  %1091 = vmatpush1.msra.mxu0 0.0
  %1092 = vmatprep.mubr.f32.mxu0 0.0
  %1093 = vmatmul.mubr.f32.gmra.mrb[0].mxu0 %v842
  %v1094 = vpop.f32.mrb[0].mxu0
  %v1095 = vadd.f32 0.0, %v1094
  %v1096 = vpop.f32.mrb[0].mxu0
  %v1097 = vadd.f32 0.0, %v1096
  %1098 = vmatprep.mubr.f32.mxu0 0.0
  %1099 = vmatmul.mubr.f32.gmra.mrb[0].mxu0 %v845
  %v1100 = vpop.f32.mrb[0].mxu0
  %v1101 = vadd.f32 0.0, %v1100
  %v1102 = vpop.f32.mrb[0].mxu0
  %v1103 = vadd.f32 0.0, %v1102
  %1104 = vdwg.mxu0
  %v1105 = vadd.f32 %v731, %v1095
  %v1106 = vadd.f32 %v733, %v1097
  %v1107 = vadd.f32 %v737, %v1101
  %v1108 = vadd.f32 %v739, %v1103
  %v1109 = vmax.f32 %v837, %v1024
  %v1110 = vmax.f32 %v838, %v1025
  %v1111 = vmax.f32 %v839, %v1026
  %v1112 = vmax.f32 %v840, %v1027
  %v1113 = vmax.f32 %v924, %v1105
  %v1114 = vmax.f32 %v925, %v1106
  %v1115 = vmax.f32 %v926, %v1107
  %v1116 = vmax.f32 %v927, %v1108
  %v1117 = vmax.f32 %v1109, %v1113
  %v1118 = vmax.f32 %v1110, %v1114
  %v1119 = vmax.f32 %v1111, %v1115
  %v1120 = vmax.f32 %v1112, %v1116
  %v1121 = vld [vmem:[%s4] sm:$0x3]
  %v1123 = vlaneseq
  %v1124 = vshrl.u32 %v1123, 7
  %v1125 = vsub.s32 0, %v1124
  %v1126 = vrot.slane %v1121, %v1125
  %v1127 = vlaneseq
  %v1128 = vshrl.u32 %v1127, 7
  %v1129 = vsub.s32 1, %v1128
  %v1130 = vrot.slane %v1121, %v1129
  %v1133 = vadd.f32 %v1117, %v1126
  %v1134 = vadd.f32 %v1118, %v1130
  %v1135 = vadd.f32 %v1119, %v1126
  %v1136 = vadd.f32 %v1120, %v1130
  %v1137 = vmax.f32 %v1133, 0.0
  %v1138 = vmax.f32 %v1134, 0.0
  %v1139 = vmax.f32 %v1135, 0.0
  %v1140 = vmax.f32 %v1136, 0.0
  %1141 = vst [vmem:[#allocation2] sm:$0xff] %v1137
  %vm1142 = vcmask 130048
  %1143 = vst.msk [vmem:[#allocation2 + $0x8] sm:$0xff] %vm1142, %v1138
  %1144 = vst [vmem:[#allocation2 + $0x10] sm:$0xff] %v1139
  %1145 = vst.msk [vmem:[#allocation2 + $0x18] sm:$0xff] %vm1142, %v1140
  %v1146 = vld [vmem:[#allocation2] sm:$0x3]
  %v1147 = vld [vmem:[#allocation2 + $0x8] sm:$0x3]
  %v1148 = vld [vmem:[%s2] sm:$0xff]
  %v1149 = vld [vmem:[%s2 + $0x8] sm:$0xff]
  %v1150 = vld [vmem:[%s2 + $0x10] sm:$0xff]
  %v1151 = vld [vmem:[%s2 + $0x18] sm:$0xff]
  %v1152 = vld [vmem:[%s2 + $0x20] sm:$0xff]
  %v1153 = vld [vmem:[%s2 + $0x28] sm:$0xff]
  %v1154 = vld [vmem:[%s2 + $0x30] sm:$0xff]
  %v1155 = vld [vmem:[%s2 + $0x38] sm:$0xff]
  %v1156 = vld [vmem:[%s2 + $0x40] sm:$0xff]
  %v1157 = vld [vmem:[%s2 + $0x48] sm:$0xff]
  %v1158 = vld [vmem:[%s2 + $0x50] sm:$0xff]
  %v1159 = vld [vmem:[%s2 + $0x58] sm:$0xff]
  %v1160 = vld [vmem:[%s2 + $0x60] sm:$0xff]
  %v1161 = vld [vmem:[%s2 + $0x68] sm:$0xff]
  %v1162 = vld [vmem:[%s2 + $0x70] sm:$0xff]
  %v1163 = vld [vmem:[%s2 + $0x78] sm:$0xff]
  %v1164 = vld [vmem:[%s2 + $0x80] sm:$0xff]
  %v1165 = vld [vmem:[%s2 + $0x88] sm:$0xff]
  %v1166 = vld [vmem:[#allocation2] sm:$0xc]
  %v1167 = vld [vmem:[#allocation2 + $0x8] sm:$0xc]
  %s1168 = scalar_lea.vmem %s2, 144
  %v1169 = vld [vmem:[%s1168] sm:$0xff]
  %v1170 = vld [vmem:[%s1168 + $0x8] sm:$0xff]
  %v1171 = vld [vmem:[%s1168 + $0x10] sm:$0xff]
  %v1172 = vld [vmem:[%s1168 + $0x18] sm:$0xff]
  %v1173 = vld [vmem:[%s1168 + $0x20] sm:$0xff]
  %v1174 = vld [vmem:[%s1168 + $0x28] sm:$0xff]
  %v1175 = vld [vmem:[%s1168 + $0x30] sm:$0xff]
  %v1176 = vld [vmem:[%s1168 + $0x38] sm:$0xff]
  %v1177 = vld [vmem:[%s1168 + $0x40] sm:$0xff]
  %v1178 = vld [vmem:[%s1168 + $0x48] sm:$0xff]
  %v1179 = vld [vmem:[%s1168 + $0x50] sm:$0xff]
  %v1180 = vld [vmem:[%s1168 + $0x58] sm:$0xff]
  %v1181 = vld [vmem:[%s1168 + $0x60] sm:$0xff]
  %v1182 = vld [vmem:[%s1168 + $0x68] sm:$0xff]
  %v1183 = vld [vmem:[%s1168 + $0x70] sm:$0xff]
  %v1184 = vld [vmem:[%s1168 + $0x78] sm:$0xff]
  %v1185 = vld [vmem:[%s1168 + $0x80] sm:$0xff]
  %v1186 = vld [vmem:[%s1168 + $0x88] sm:$0xff]
  %v1189 = vrot.slane %v1166, 2
  %v1190 = vrot.slane %v1167, 2
  %v1192 = vsel %vm1142, %v1190, 0
  %1194 = vmatprep.subr.mxu0 0.0
  %1195 = vmatpush1.msra.mxu0 %v1169
  %1196 = vmatprep.subr.mxu0 0.0
  %1197 = vmatpush1.msra.mxu0 %v1170
  %1198 = vmatprep.subr.mxu0 0.0
  %1199 = vmatpush1.msra.mxu0 %v1171
  %1200 = vmatprep.subr.mxu0 0.0
  %1201 = vmatpush1.msra.mxu0 %v1172
  %1202 = vmatprep.subr.mxu0 0.0
  %1203 = vmatpush1.msra.mxu0 %v1173
  %1204 = vmatprep.subr.mxu0 0.0
  %1205 = vmatpush1.msra.mxu0 %v1174
  %1206 = vmatprep.subr.mxu0 0.0
  %1207 = vmatpush1.msra.mxu0 %v1175
  %1208 = vmatprep.subr.mxu0 0.0
  %1209 = vmatpush1.msra.mxu0 %v1176
  %1210 = vmatprep.subr.mxu0 0.0
  %1211 = vmatpush1.msra.mxu0 %v1177
  %1212 = vmatprep.subr.mxu0 0.0
  %1213 = vmatpush1.msra.mxu0 %v1178
  %1214 = vmatprep.subr.mxu0 0.0
  %1215 = vmatpush1.msra.mxu0 %v1179
  %1216 = vmatprep.subr.mxu0 0.0
  %1217 = vmatpush1.msra.mxu0 %v1180
  %1218 = vmatprep.subr.mxu0 0.0
  %1219 = vmatpush1.msra.mxu0 %v1181
  %1220 = vmatprep.subr.mxu0 0.0
  %1221 = vmatpush1.msra.mxu0 %v1182
  %1222 = vmatprep.subr.mxu0 0.0
  %1223 = vmatpush1.msra.mxu0 %v1183
  %1224 = vmatprep.subr.mxu0 0.0
  %1225 = vmatpush1.msra.mxu0 %v1184
  %1226 = vmatprep.subr.mxu0 0.0
  %1227 = vmatpush1.msra.mxu0 %v1185
  %1228 = vmatprep.subr.mxu0 0.0
  %1229 = vmatpush1.msra.mxu0 %v1186
  %1230 = vmatprep.subr.mxu0 0.0
  %1231 = vmatpush1.msra.mxu0 0.0
  %1232 = vmatprep.subr.mxu0 0.0
  %1233 = vmatpush1.msra.mxu0 0.0
  %1234 = vmatprep.subr.mxu0 0.0
  %1235 = vmatpush1.msra.mxu0 0.0
  %1236 = vmatprep.subr.mxu0 0.0
  %1237 = vmatpush1.msra.mxu0 0.0
  %1238 = vmatprep.subr.mxu0 0.0
  %1239 = vmatpush1.msra.mxu0 0.0
  %1240 = vmatprep.subr.mxu0 0.0
  %1241 = vmatpush1.msra.mxu0 0.0
  %1242 = vmatprep.subr.mxu0 0.0
  %1243 = vmatpush1.msra.mxu0 0.0
  %1244 = vmatprep.subr.mxu0 0.0
  %1245 = vmatpush1.msra.mxu0 0.0
  %1246 = vmatprep.subr.mxu0 0.0
  %1247 = vmatpush1.msra.mxu0 0.0
  %1248 = vmatprep.subr.mxu0 0.0
  %1249 = vmatpush1.msra.mxu0 0.0
  %1250 = vmatprep.subr.mxu0 0.0
  %1251 = vmatpush1.msra.mxu0 0.0
  %1252 = vmatprep.subr.mxu0 0.0
  %1253 = vmatpush1.msra.mxu0 0.0
  %1254 = vmatprep.subr.mxu0 0.0
  %1255 = vmatpush1.msra.mxu0 0.0
  %1256 = vmatprep.subr.mxu0 0.0
  %1257 = vmatpush1.msra.mxu0 0.0
  %1258 = vmatprep.mubr.f32.mxu0 %v1192
  %1259 = vmatmul.mubr.f32.gmra.mrb[0].mxu0 %v1189
  %v1260 = vpop.f32.mrb[0].mxu0
  %v1261 = vadd.f32 0.0, %v1260
  %v1262 = vpop.f32.mrb[0].mxu0
  %1263 = vdwg.mxu0
  %v1265 = vsel %vm1142, %v1147, 0
  %1267 = vmatprep.subr.mxu0 0.0
  %1268 = vmatpush1.msra.mxu0 %v1148
  %1269 = vmatprep.subr.mxu0 0.0
  %1270 = vmatpush1.msra.mxu0 %v1149
  %1271 = vmatprep.subr.mxu0 0.0
  %1272 = vmatpush1.msra.mxu0 %v1150
  %1273 = vmatprep.subr.mxu0 0.0
  %1274 = vmatpush1.msra.mxu0 %v1151
  %1275 = vmatprep.subr.mxu0 0.0
  %1276 = vmatpush1.msra.mxu0 %v1152
  %1277 = vmatprep.subr.mxu0 0.0
  %1278 = vmatpush1.msra.mxu0 %v1153
  %1279 = vmatprep.subr.mxu0 0.0
  %1280 = vmatpush1.msra.mxu0 %v1154
  %1281 = vmatprep.subr.mxu0 0.0
  %1282 = vmatpush1.msra.mxu0 %v1155
  %1283 = vmatprep.subr.mxu0 0.0
  %1284 = vmatpush1.msra.mxu0 %v1156
  %1285 = vmatprep.subr.mxu0 0.0
  %1286 = vmatpush1.msra.mxu0 %v1157
  %1287 = vmatprep.subr.mxu0 0.0
  %1288 = vmatpush1.msra.mxu0 %v1158
  %1289 = vmatprep.subr.mxu0 0.0
  %1290 = vmatpush1.msra.mxu0 %v1159
  %1291 = vmatprep.subr.mxu0 0.0
  %1292 = vmatpush1.msra.mxu0 %v1160
  %1293 = vmatprep.subr.mxu0 0.0
  %1294 = vmatpush1.msra.mxu0 %v1161
  %1295 = vmatprep.subr.mxu0 0.0
  %1296 = vmatpush1.msra.mxu0 %v1162
  %1297 = vmatprep.subr.mxu0 0.0
  %1298 = vmatpush1.msra.mxu0 %v1163
  %1299 = vmatprep.subr.mxu0 0.0
  %1300 = vmatpush1.msra.mxu0 %v1164
  %1301 = vmatprep.subr.mxu0 0.0
  %1302 = vmatpush1.msra.mxu0 %v1165
  %1303 = vmatprep.subr.mxu0 0.0
  %1304 = vmatpush1.msra.mxu0 0.0
  %1305 = vmatprep.subr.mxu0 0.0
  %1306 = vmatpush1.msra.mxu0 0.0
  %1307 = vmatprep.subr.mxu0 0.0
  %1308 = vmatpush1.msra.mxu0 0.0
  %1309 = vmatprep.subr.mxu0 0.0
  %1310 = vmatpush1.msra.mxu0 0.0
  %1311 = vmatprep.subr.mxu0 0.0
  %1312 = vmatpush1.msra.mxu0 0.0
  %1313 = vmatprep.subr.mxu0 0.0
  %1314 = vmatpush1.msra.mxu0 0.0
  %1315 = vmatprep.subr.mxu0 0.0
  %1316 = vmatpush1.msra.mxu0 0.0
  %1317 = vmatprep.subr.mxu0 0.0
  %1318 = vmatpush1.msra.mxu0 0.0
  %1319 = vmatprep.subr.mxu0 0.0
  %1320 = vmatpush1.msra.mxu0 0.0
  %1321 = vmatprep.subr.mxu0 0.0
  %1322 = vmatpush1.msra.mxu0 0.0
  %1323 = vmatprep.subr.mxu0 0.0
  %1324 = vmatpush1.msra.mxu0 0.0
  %1325 = vmatprep.subr.mxu0 0.0
  %1326 = vmatpush1.msra.mxu0 0.0
  %1327 = vmatprep.subr.mxu0 0.0
  %1328 = vmatpush1.msra.mxu0 0.0
  %1329 = vmatprep.subr.mxu0 0.0
  %1330 = vmatpush1.msra.mxu0 0.0
  %1331 = vmatprep.mubr.f32.mxu0 %v1265
  %1332 = vmatmul.mubr.f32.gmra.mrb[0].mxu0 %v1146
  %v1333 = vpop.f32.mrb[0].mxu0
  %v1334 = vadd.f32 %v1261, %v1333
  %v1335 = vpop.f32.mrb[0].mxu0
  %1336 = vdwg.mxu0
  %v1337 = vld [vmem:[#allocation2] sm:$0x30]
  %v1338 = vld [vmem:[#allocation2 + $0x8] sm:$0x30]
  %s1339 = scalar_lea.vmem %s2, 288
  %v1340 = vld [vmem:[%s1339] sm:$0xff]
  %v1341 = vld [vmem:[%s1339 + $0x8] sm:$0xff]
  %v1342 = vld [vmem:[%s1339 + $0x10] sm:$0xff]
  %v1343 = vld [vmem:[%s1339 + $0x18] sm:$0xff]
  %v1344 = vld [vmem:[%s1339 + $0x20] sm:$0xff]
  %v1345 = vld [vmem:[%s1339 + $0x28] sm:$0xff]
  %v1346 = vld [vmem:[%s1339 + $0x30] sm:$0xff]
  %v1347 = vld [vmem:[%s1339 + $0x38] sm:$0xff]
  %v1348 = vld [vmem:[%s1339 + $0x40] sm:$0xff]
  %v1349 = vld [vmem:[%s1339 + $0x48] sm:$0xff]
  %v1350 = vld [vmem:[%s1339 + $0x50] sm:$0xff]
  %v1351 = vld [vmem:[%s1339 + $0x58] sm:$0xff]
  %v1352 = vld [vmem:[%s1339 + $0x60] sm:$0xff]
  %v1353 = vld [vmem:[%s1339 + $0x68] sm:$0xff]
  %v1354 = vld [vmem:[%s1339 + $0x70] sm:$0xff]
  %v1355 = vld [vmem:[%s1339 + $0x78] sm:$0xff]
  %v1356 = vld [vmem:[%s1339 + $0x80] sm:$0xff]
  %v1357 = vld [vmem:[%s1339 + $0x88] sm:$0xff]
  %v1360 = vrot.slane %v1337, 4
  %v1361 = vrot.slane %v1338, 4
  %v1363 = vsel %vm1142, %v1361, 0
  %1365 = vmatprep.subr.mxu0 0.0
  %1366 = vmatpush1.msra.mxu0 %v1340
  %1367 = vmatprep.subr.mxu0 0.0
  %1368 = vmatpush1.msra.mxu0 %v1341
  %1369 = vmatprep.subr.mxu0 0.0
  %1370 = vmatpush1.msra.mxu0 %v1342
  %1371 = vmatprep.subr.mxu0 0.0
  %1372 = vmatpush1.msra.mxu0 %v1343
  %1373 = vmatprep.subr.mxu0 0.0
  %1374 = vmatpush1.msra.mxu0 %v1344
  %1375 = vmatprep.subr.mxu0 0.0
  %1376 = vmatpush1.msra.mxu0 %v1345
  %1377 = vmatprep.subr.mxu0 0.0
  %1378 = vmatpush1.msra.mxu0 %v1346
  %1379 = vmatprep.subr.mxu0 0.0
  %1380 = vmatpush1.msra.mxu0 %v1347
  %1381 = vmatprep.subr.mxu0 0.0
  %1382 = vmatpush1.msra.mxu0 %v1348
  %1383 = vmatprep.subr.mxu0 0.0
  %1384 = vmatpush1.msra.mxu0 %v1349
  %1385 = vmatprep.subr.mxu0 0.0
  %1386 = vmatpush1.msra.mxu0 %v1350
  %1387 = vmatprep.subr.mxu0 0.0
  %1388 = vmatpush1.msra.mxu0 %v1351
  %1389 = vmatprep.subr.mxu0 0.0
  %1390 = vmatpush1.msra.mxu0 %v1352
  %1391 = vmatprep.subr.mxu0 0.0
  %1392 = vmatpush1.msra.mxu0 %v1353
  %1393 = vmatprep.subr.mxu0 0.0
  %1394 = vmatpush1.msra.mxu0 %v1354
  %1395 = vmatprep.subr.mxu0 0.0
  %1396 = vmatpush1.msra.mxu0 %v1355
  %1397 = vmatprep.subr.mxu0 0.0
  %1398 = vmatpush1.msra.mxu0 %v1356
  %1399 = vmatprep.subr.mxu0 0.0
  %1400 = vmatpush1.msra.mxu0 %v1357
  %1401 = vmatprep.subr.mxu0 0.0
  %1402 = vmatpush1.msra.mxu0 0.0
  %1403 = vmatprep.subr.mxu0 0.0
  %1404 = vmatpush1.msra.mxu0 0.0
  %1405 = vmatprep.subr.mxu0 0.0
  %1406 = vmatpush1.msra.mxu0 0.0
  %1407 = vmatprep.subr.mxu0 0.0
  %1408 = vmatpush1.msra.mxu0 0.0
  %1409 = vmatprep.subr.mxu0 0.0
  %1410 = vmatpush1.msra.mxu0 0.0
  %1411 = vmatprep.subr.mxu0 0.0
  %1412 = vmatpush1.msra.mxu0 0.0
  %1413 = vmatprep.subr.mxu0 0.0
  %1414 = vmatpush1.msra.mxu0 0.0
  %1415 = vmatprep.subr.mxu0 0.0
  %1416 = vmatpush1.msra.mxu0 0.0
  %1417 = vmatprep.subr.mxu0 0.0
  %1418 = vmatpush1.msra.mxu0 0.0
  %1419 = vmatprep.subr.mxu0 0.0
  %1420 = vmatpush1.msra.mxu0 0.0
  %1421 = vmatprep.subr.mxu0 0.0
  %1422 = vmatpush1.msra.mxu0 0.0
  %1423 = vmatprep.subr.mxu0 0.0
  %1424 = vmatpush1.msra.mxu0 0.0
  %1425 = vmatprep.subr.mxu0 0.0
  %1426 = vmatpush1.msra.mxu0 0.0
  %1427 = vmatprep.subr.mxu0 0.0
  %1428 = vmatpush1.msra.mxu0 0.0
  %1429 = vmatprep.mubr.f32.mxu0 %v1363
  %1430 = vmatmul.mubr.f32.gmra.mrb[0].mxu0 %v1360
  %v1431 = vpop.f32.mrb[0].mxu0
  %v1432 = vadd.f32 0.0, %v1431
  %v1433 = vpop.f32.mrb[0].mxu0
  %1434 = vdwg.mxu0
  %v1435 = vadd.f32 %v1334, %v1432
  %v1436 = vld [vmem:[#allocation2] sm:$0xc0]
  %v1437 = vld [vmem:[#allocation2 + $0x8] sm:$0xc0]
  %s1438 = scalar_lea.vmem %s2, 432
  %v1439 = vld [vmem:[%s1438] sm:$0xff]
  %v1440 = vld [vmem:[%s1438 + $0x8] sm:$0xff]
  %v1441 = vld [vmem:[%s1438 + $0x10] sm:$0xff]
  %v1442 = vld [vmem:[%s1438 + $0x18] sm:$0xff]
  %v1443 = vld [vmem:[%s1438 + $0x20] sm:$0xff]
  %v1444 = vld [vmem:[%s1438 + $0x28] sm:$0xff]
  %v1445 = vld [vmem:[%s1438 + $0x30] sm:$0xff]
  %v1446 = vld [vmem:[%s1438 + $0x38] sm:$0xff]
  %v1447 = vld [vmem:[%s1438 + $0x40] sm:$0xff]
  %v1448 = vld [vmem:[%s1438 + $0x48] sm:$0xff]
  %v1449 = vld [vmem:[%s1438 + $0x50] sm:$0xff]
  %v1450 = vld [vmem:[%s1438 + $0x58] sm:$0xff]
  %v1451 = vld [vmem:[%s1438 + $0x60] sm:$0xff]
  %v1452 = vld [vmem:[%s1438 + $0x68] sm:$0xff]
  %v1453 = vld [vmem:[%s1438 + $0x70] sm:$0xff]
  %v1454 = vld [vmem:[%s1438 + $0x78] sm:$0xff]
  %v1455 = vld [vmem:[%s1438 + $0x80] sm:$0xff]
  %v1456 = vld [vmem:[%s1438 + $0x88] sm:$0xff]
  %v1459 = vrot.slane %v1436, 6
  %v1460 = vrot.slane %v1437, 6
  %v1462 = vsel %vm1142, %v1460, 0
  %1464 = vmatprep.subr.mxu0 0.0
  %1465 = vmatpush1.msra.mxu0 %v1439
  %1466 = vmatprep.subr.mxu0 0.0
  %1467 = vmatpush1.msra.mxu0 %v1440
  %1468 = vmatprep.subr.mxu0 0.0
  %1469 = vmatpush1.msra.mxu0 %v1441
  %1470 = vmatprep.subr.mxu0 0.0
  %1471 = vmatpush1.msra.mxu0 %v1442
  %1472 = vmatprep.subr.mxu0 0.0
  %1473 = vmatpush1.msra.mxu0 %v1443
  %1474 = vmatprep.subr.mxu0 0.0
  %1475 = vmatpush1.msra.mxu0 %v1444
  %1476 = vmatprep.subr.mxu0 0.0
  %1477 = vmatpush1.msra.mxu0 %v1445
  %1478 = vmatprep.subr.mxu0 0.0
  %1479 = vmatpush1.msra.mxu0 %v1446
  %1480 = vmatprep.subr.mxu0 0.0
  %1481 = vmatpush1.msra.mxu0 %v1447
  %1482 = vmatprep.subr.mxu0 0.0
  %1483 = vmatpush1.msra.mxu0 %v1448
  %1484 = vmatprep.subr.mxu0 0.0
  %1485 = vmatpush1.msra.mxu0 %v1449
  %1486 = vmatprep.subr.mxu0 0.0
  %1487 = vmatpush1.msra.mxu0 %v1450
  %1488 = vmatprep.subr.mxu0 0.0
  %1489 = vmatpush1.msra.mxu0 %v1451
  %1490 = vmatprep.subr.mxu0 0.0
  %1491 = vmatpush1.msra.mxu0 %v1452
  %1492 = vmatprep.subr.mxu0 0.0
  %1493 = vmatpush1.msra.mxu0 %v1453
  %1494 = vmatprep.subr.mxu0 0.0
  %1495 = vmatpush1.msra.mxu0 %v1454
  %1496 = vmatprep.subr.mxu0 0.0
  %1497 = vmatpush1.msra.mxu0 %v1455
  %1498 = vmatprep.subr.mxu0 0.0
  %1499 = vmatpush1.msra.mxu0 %v1456
  %1500 = vmatprep.subr.mxu0 0.0
  %1501 = vmatpush1.msra.mxu0 0.0
  %1502 = vmatprep.subr.mxu0 0.0
  %1503 = vmatpush1.msra.mxu0 0.0
  %1504 = vmatprep.subr.mxu0 0.0
  %1505 = vmatpush1.msra.mxu0 0.0
  %1506 = vmatprep.subr.mxu0 0.0
  %1507 = vmatpush1.msra.mxu0 0.0
  %1508 = vmatprep.subr.mxu0 0.0
  %1509 = vmatpush1.msra.mxu0 0.0
  %1510 = vmatprep.subr.mxu0 0.0
  %1511 = vmatpush1.msra.mxu0 0.0
  %1512 = vmatprep.subr.mxu0 0.0
  %1513 = vmatpush1.msra.mxu0 0.0
  %1514 = vmatprep.subr.mxu0 0.0
  %1515 = vmatpush1.msra.mxu0 0.0
  %1516 = vmatprep.subr.mxu0 0.0
  %1517 = vmatpush1.msra.mxu0 0.0
  %1518 = vmatprep.subr.mxu0 0.0
  %1519 = vmatpush1.msra.mxu0 0.0
  %1520 = vmatprep.subr.mxu0 0.0
  %1521 = vmatpush1.msra.mxu0 0.0
  %1522 = vmatprep.subr.mxu0 0.0
  %1523 = vmatpush1.msra.mxu0 0.0
  %1524 = vmatprep.subr.mxu0 0.0
  %1525 = vmatpush1.msra.mxu0 0.0
  %1526 = vmatprep.subr.mxu0 0.0
  %1527 = vmatpush1.msra.mxu0 0.0
  %1528 = vmatprep.mubr.f32.mxu0 %v1462
  %1529 = vmatmul.mubr.f32.gmra.mrb[0].mxu0 %v1459
  %v1530 = vpop.f32.mrb[0].mxu0
  %v1531 = vadd.f32 0.0, %v1530
  %v1532 = vpop.f32.mrb[0].mxu0
  %1533 = vdwg.mxu0
  %v1534 = vadd.f32 %v1435, %v1531
  %v1535 = vld [vmem:[#allocation2 + $0x10] sm:$0x3]
  %v1536 = vld [vmem:[#allocation2 + $0x18] sm:$0x3]
  %s1537 = scalar_lea.vmem %s2, 576
  %v1538 = vld [vmem:[%s1537] sm:$0xff]
  %v1539 = vld [vmem:[%s1537 + $0x8] sm:$0xff]
  %v1540 = vld [vmem:[%s1537 + $0x10] sm:$0xff]
  %v1541 = vld [vmem:[%s1537 + $0x18] sm:$0xff]
  %v1542 = vld [vmem:[%s1537 + $0x20] sm:$0xff]
  %v1543 = vld [vmem:[%s1537 + $0x28] sm:$0xff]
  %v1544 = vld [vmem:[%s1537 + $0x30] sm:$0xff]
  %v1545 = vld [vmem:[%s1537 + $0x38] sm:$0xff]
  %v1546 = vld [vmem:[%s1537 + $0x40] sm:$0xff]
  %v1547 = vld [vmem:[%s1537 + $0x48] sm:$0xff]
  %v1548 = vld [vmem:[%s1537 + $0x50] sm:$0xff]
  %v1549 = vld [vmem:[%s1537 + $0x58] sm:$0xff]
  %v1550 = vld [vmem:[%s1537 + $0x60] sm:$0xff]
  %v1551 = vld [vmem:[%s1537 + $0x68] sm:$0xff]
  %v1552 = vld [vmem:[%s1537 + $0x70] sm:$0xff]
  %v1553 = vld [vmem:[%s1537 + $0x78] sm:$0xff]
  %v1554 = vld [vmem:[%s1537 + $0x80] sm:$0xff]
  %v1555 = vld [vmem:[%s1537 + $0x88] sm:$0xff]
  %v1557 = vsel %vm1142, %v1536, 0
  %1559 = vmatprep.subr.mxu0 0.0
  %1560 = vmatpush1.msra.mxu0 %v1538
  %1561 = vmatprep.subr.mxu0 0.0
  %1562 = vmatpush1.msra.mxu0 %v1539
  %1563 = vmatprep.subr.mxu0 0.0
  %1564 = vmatpush1.msra.mxu0 %v1540
  %1565 = vmatprep.subr.mxu0 0.0
  %1566 = vmatpush1.msra.mxu0 %v1541
  %1567 = vmatprep.subr.mxu0 0.0
  %1568 = vmatpush1.msra.mxu0 %v1542
  %1569 = vmatprep.subr.mxu0 0.0
  %1570 = vmatpush1.msra.mxu0 %v1543
  %1571 = vmatprep.subr.mxu0 0.0
  %1572 = vmatpush1.msra.mxu0 %v1544
  %1573 = vmatprep.subr.mxu0 0.0
  %1574 = vmatpush1.msra.mxu0 %v1545
  %1575 = vmatprep.subr.mxu0 0.0
  %1576 = vmatpush1.msra.mxu0 %v1546
  %1577 = vmatprep.subr.mxu0 0.0
  %1578 = vmatpush1.msra.mxu0 %v1547
  %1579 = vmatprep.subr.mxu0 0.0
  %1580 = vmatpush1.msra.mxu0 %v1548
  %1581 = vmatprep.subr.mxu0 0.0
  %1582 = vmatpush1.msra.mxu0 %v1549
  %1583 = vmatprep.subr.mxu0 0.0
  %1584 = vmatpush1.msra.mxu0 %v1550
  %1585 = vmatprep.subr.mxu0 0.0
  %1586 = vmatpush1.msra.mxu0 %v1551
  %1587 = vmatprep.subr.mxu0 0.0
  %1588 = vmatpush1.msra.mxu0 %v1552
  %1589 = vmatprep.subr.mxu0 0.0
  %1590 = vmatpush1.msra.mxu0 %v1553
  %1591 = vmatprep.subr.mxu0 0.0
  %1592 = vmatpush1.msra.mxu0 %v1554
  %1593 = vmatprep.subr.mxu0 0.0
  %1594 = vmatpush1.msra.mxu0 %v1555
  %1595 = vmatprep.subr.mxu0 0.0
  %1596 = vmatpush1.msra.mxu0 0.0
  %1597 = vmatprep.subr.mxu0 0.0
  %1598 = vmatpush1.msra.mxu0 0.0
  %1599 = vmatprep.subr.mxu0 0.0
  %1600 = vmatpush1.msra.mxu0 0.0
  %1601 = vmatprep.subr.mxu0 0.0
  %1602 = vmatpush1.msra.mxu0 0.0
  %1603 = vmatprep.subr.mxu0 0.0
  %1604 = vmatpush1.msra.mxu0 0.0
  %1605 = vmatprep.subr.mxu0 0.0
  %1606 = vmatpush1.msra.mxu0 0.0
  %1607 = vmatprep.subr.mxu0 0.0
  %1608 = vmatpush1.msra.mxu0 0.0
  %1609 = vmatprep.subr.mxu0 0.0
  %1610 = vmatpush1.msra.mxu0 0.0
  %1611 = vmatprep.subr.mxu0 0.0
  %1612 = vmatpush1.msra.mxu0 0.0
  %1613 = vmatprep.subr.mxu0 0.0
  %1614 = vmatpush1.msra.mxu0 0.0
  %1615 = vmatprep.subr.mxu0 0.0
  %1616 = vmatpush1.msra.mxu0 0.0
  %1617 = vmatprep.subr.mxu0 0.0
  %1618 = vmatpush1.msra.mxu0 0.0
  %1619 = vmatprep.subr.mxu0 0.0
  %1620 = vmatpush1.msra.mxu0 0.0
  %1621 = vmatprep.subr.mxu0 0.0
  %1622 = vmatpush1.msra.mxu0 0.0
  %1623 = vmatprep.mubr.f32.mxu0 %v1557
  %1624 = vmatmul.mubr.f32.gmra.mrb[0].mxu0 %v1535
  %v1625 = vpop.f32.mrb[0].mxu0
  %v1626 = vadd.f32 0.0, %v1625
  %v1627 = vpop.f32.mrb[0].mxu0
  %1628 = vdwg.mxu0
  %v1629 = vadd.f32 %v1534, %v1626
  %v1630 = vld [vmem:[#allocation2 + $0x10] sm:$0xc]
  %v1631 = vld [vmem:[#allocation2 + $0x18] sm:$0xc]
  %s1632 = scalar_lea.vmem %s2, 720
  %v1633 = vld [vmem:[%s1632] sm:$0xff]
  %v1634 = vld [vmem:[%s1632 + $0x8] sm:$0xff]
  %v1635 = vld [vmem:[%s1632 + $0x10] sm:$0xff]
  %v1636 = vld [vmem:[%s1632 + $0x18] sm:$0xff]
  %v1637 = vld [vmem:[%s1632 + $0x20] sm:$0xff]
  %v1638 = vld [vmem:[%s1632 + $0x28] sm:$0xff]
  %v1639 = vld [vmem:[%s1632 + $0x30] sm:$0xff]
  %v1640 = vld [vmem:[%s1632 + $0x38] sm:$0xff]
  %v1641 = vld [vmem:[%s1632 + $0x40] sm:$0xff]
  %v1642 = vld [vmem:[%s1632 + $0x48] sm:$0xff]
  %v1643 = vld [vmem:[%s1632 + $0x50] sm:$0xff]
  %v1644 = vld [vmem:[%s1632 + $0x58] sm:$0xff]
  %v1645 = vld [vmem:[%s1632 + $0x60] sm:$0xff]
  %v1646 = vld [vmem:[%s1632 + $0x68] sm:$0xff]
  %v1647 = vld [vmem:[%s1632 + $0x70] sm:$0xff]
  %v1648 = vld [vmem:[%s1632 + $0x78] sm:$0xff]
  %v1649 = vld [vmem:[%s1632 + $0x80] sm:$0xff]
  %v1650 = vld [vmem:[%s1632 + $0x88] sm:$0xff]
  %v1653 = vrot.slane %v1630, 2
  %v1654 = vrot.slane %v1631, 2
  %v1656 = vsel %vm1142, %v1654, 0
  %1658 = vmatprep.subr.mxu0 0.0
  %1659 = vmatpush1.msra.mxu0 %v1633
  %1660 = vmatprep.subr.mxu0 0.0
  %1661 = vmatpush1.msra.mxu0 %v1634
  %1662 = vmatprep.subr.mxu0 0.0
  %1663 = vmatpush1.msra.mxu0 %v1635
  %1664 = vmatprep.subr.mxu0 0.0
  %1665 = vmatpush1.msra.mxu0 %v1636
  %1666 = vmatprep.subr.mxu0 0.0
  %1667 = vmatpush1.msra.mxu0 %v1637
  %1668 = vmatprep.subr.mxu0 0.0
  %1669 = vmatpush1.msra.mxu0 %v1638
  %1670 = vmatprep.subr.mxu0 0.0
  %1671 = vmatpush1.msra.mxu0 %v1639
  %1672 = vmatprep.subr.mxu0 0.0
  %1673 = vmatpush1.msra.mxu0 %v1640
  %1674 = vmatprep.subr.mxu0 0.0
  %1675 = vmatpush1.msra.mxu0 %v1641
  %1676 = vmatprep.subr.mxu0 0.0
  %1677 = vmatpush1.msra.mxu0 %v1642
  %1678 = vmatprep.subr.mxu0 0.0
  %1679 = vmatpush1.msra.mxu0 %v1643
  %1680 = vmatprep.subr.mxu0 0.0
  %1681 = vmatpush1.msra.mxu0 %v1644
  %1682 = vmatprep.subr.mxu0 0.0
  %1683 = vmatpush1.msra.mxu0 %v1645
  %1684 = vmatprep.subr.mxu0 0.0
  %1685 = vmatpush1.msra.mxu0 %v1646
  %1686 = vmatprep.subr.mxu0 0.0
  %1687 = vmatpush1.msra.mxu0 %v1647
  %1688 = vmatprep.subr.mxu0 0.0
  %1689 = vmatpush1.msra.mxu0 %v1648
  %1690 = vmatprep.subr.mxu0 0.0
  %1691 = vmatpush1.msra.mxu0 %v1649
  %1692 = vmatprep.subr.mxu0 0.0
  %1693 = vmatpush1.msra.mxu0 %v1650
  %1694 = vmatprep.subr.mxu0 0.0
  %1695 = vmatpush1.msra.mxu0 0.0
  %1696 = vmatprep.subr.mxu0 0.0
  %1697 = vmatpush1.msra.mxu0 0.0
  %1698 = vmatprep.subr.mxu0 0.0
  %1699 = vmatpush1.msra.mxu0 0.0
  %1700 = vmatprep.subr.mxu0 0.0
  %1701 = vmatpush1.msra.mxu0 0.0
  %1702 = vmatprep.subr.mxu0 0.0
  %1703 = vmatpush1.msra.mxu0 0.0
  %1704 = vmatprep.subr.mxu0 0.0
  %1705 = vmatpush1.msra.mxu0 0.0
  %1706 = vmatprep.subr.mxu0 0.0
  %1707 = vmatpush1.msra.mxu0 0.0
  %1708 = vmatprep.subr.mxu0 0.0
  %1709 = vmatpush1.msra.mxu0 0.0
  %1710 = vmatprep.subr.mxu0 0.0
  %1711 = vmatpush1.msra.mxu0 0.0
  %1712 = vmatprep.subr.mxu0 0.0
  %1713 = vmatpush1.msra.mxu0 0.0
  %1714 = vmatprep.subr.mxu0 0.0
  %1715 = vmatpush1.msra.mxu0 0.0
  %1716 = vmatprep.subr.mxu0 0.0
  %1717 = vmatpush1.msra.mxu0 0.0
  %1718 = vmatprep.subr.mxu0 0.0
  %1719 = vmatpush1.msra.mxu0 0.0
  %1720 = vmatprep.subr.mxu0 0.0
  %1721 = vmatpush1.msra.mxu0 0.0
  %1722 = vmatprep.mubr.f32.mxu0 %v1656
  %1723 = vmatmul.mubr.f32.gmra.mrb[0].mxu0 %v1653
  %v1724 = vpop.f32.mrb[0].mxu0
  %v1725 = vadd.f32 0.0, %v1724
  %v1726 = vpop.f32.mrb[0].mxu0
  %1727 = vdwg.mxu0
  %v1728 = vadd.f32 %v1629, %v1725
  %v1729 = vld [vmem:[#allocation2 + $0x10] sm:$0x30]
  %v1730 = vld [vmem:[#allocation2 + $0x18] sm:$0x30]
  %s1731 = scalar_lea.vmem %s2, 864
  %v1732 = vld [vmem:[%s1731] sm:$0xff]
  %v1733 = vld [vmem:[%s1731 + $0x8] sm:$0xff]
  %v1734 = vld [vmem:[%s1731 + $0x10] sm:$0xff]
  %v1735 = vld [vmem:[%s1731 + $0x18] sm:$0xff]
  %v1736 = vld [vmem:[%s1731 + $0x20] sm:$0xff]
  %v1737 = vld [vmem:[%s1731 + $0x28] sm:$0xff]
  %v1738 = vld [vmem:[%s1731 + $0x30] sm:$0xff]
  %v1739 = vld [vmem:[%s1731 + $0x38] sm:$0xff]
  %v1740 = vld [vmem:[%s1731 + $0x40] sm:$0xff]
  %v1741 = vld [vmem:[%s1731 + $0x48] sm:$0xff]
  %v1742 = vld [vmem:[%s1731 + $0x50] sm:$0xff]
  %v1743 = vld [vmem:[%s1731 + $0x58] sm:$0xff]
  %v1744 = vld [vmem:[%s1731 + $0x60] sm:$0xff]
  %v1745 = vld [vmem:[%s1731 + $0x68] sm:$0xff]
  %v1746 = vld [vmem:[%s1731 + $0x70] sm:$0xff]
  %v1747 = vld [vmem:[%s1731 + $0x78] sm:$0xff]
  %v1748 = vld [vmem:[%s1731 + $0x80] sm:$0xff]
  %v1749 = vld [vmem:[%s1731 + $0x88] sm:$0xff]
  %v1752 = vrot.slane %v1729, 4
  %v1753 = vrot.slane %v1730, 4
  %v1755 = vsel %vm1142, %v1753, 0
  %1757 = vmatprep.subr.mxu0 0.0
  %1758 = vmatpush1.msra.mxu0 %v1732
  %1759 = vmatprep.subr.mxu0 0.0
  %1760 = vmatpush1.msra.mxu0 %v1733
  %1761 = vmatprep.subr.mxu0 0.0
  %1762 = vmatpush1.msra.mxu0 %v1734
  %1763 = vmatprep.subr.mxu0 0.0
  %1764 = vmatpush1.msra.mxu0 %v1735
  %1765 = vmatprep.subr.mxu0 0.0
  %1766 = vmatpush1.msra.mxu0 %v1736
  %1767 = vmatprep.subr.mxu0 0.0
  %1768 = vmatpush1.msra.mxu0 %v1737
  %1769 = vmatprep.subr.mxu0 0.0
  %1770 = vmatpush1.msra.mxu0 %v1738
  %1771 = vmatprep.subr.mxu0 0.0
  %1772 = vmatpush1.msra.mxu0 %v1739
  %1773 = vmatprep.subr.mxu0 0.0
  %1774 = vmatpush1.msra.mxu0 %v1740
  %1775 = vmatprep.subr.mxu0 0.0
  %1776 = vmatpush1.msra.mxu0 %v1741
  %1777 = vmatprep.subr.mxu0 0.0
  %1778 = vmatpush1.msra.mxu0 %v1742
  %1779 = vmatprep.subr.mxu0 0.0
  %1780 = vmatpush1.msra.mxu0 %v1743
  %1781 = vmatprep.subr.mxu0 0.0
  %1782 = vmatpush1.msra.mxu0 %v1744
  %1783 = vmatprep.subr.mxu0 0.0
  %1784 = vmatpush1.msra.mxu0 %v1745
  %1785 = vmatprep.subr.mxu0 0.0
  %1786 = vmatpush1.msra.mxu0 %v1746
  %1787 = vmatprep.subr.mxu0 0.0
  %1788 = vmatpush1.msra.mxu0 %v1747
  %1789 = vmatprep.subr.mxu0 0.0
  %1790 = vmatpush1.msra.mxu0 %v1748
  %1791 = vmatprep.subr.mxu0 0.0
  %1792 = vmatpush1.msra.mxu0 %v1749
  %1793 = vmatprep.subr.mxu0 0.0
  %1794 = vmatpush1.msra.mxu0 0.0
  %1795 = vmatprep.subr.mxu0 0.0
  %1796 = vmatpush1.msra.mxu0 0.0
  %1797 = vmatprep.subr.mxu0 0.0
  %1798 = vmatpush1.msra.mxu0 0.0
  %1799 = vmatprep.subr.mxu0 0.0
  %1800 = vmatpush1.msra.mxu0 0.0
  %1801 = vmatprep.subr.mxu0 0.0
  %1802 = vmatpush1.msra.mxu0 0.0
  %1803 = vmatprep.subr.mxu0 0.0
  %1804 = vmatpush1.msra.mxu0 0.0
  %1805 = vmatprep.subr.mxu0 0.0
  %1806 = vmatpush1.msra.mxu0 0.0
  %1807 = vmatprep.subr.mxu0 0.0
  %1808 = vmatpush1.msra.mxu0 0.0
  %1809 = vmatprep.subr.mxu0 0.0
  %1810 = vmatpush1.msra.mxu0 0.0
  %1811 = vmatprep.subr.mxu0 0.0
  %1812 = vmatpush1.msra.mxu0 0.0
  %1813 = vmatprep.subr.mxu0 0.0
  %1814 = vmatpush1.msra.mxu0 0.0
  %1815 = vmatprep.subr.mxu0 0.0
  %1816 = vmatpush1.msra.mxu0 0.0
  %1817 = vmatprep.subr.mxu0 0.0
  %1818 = vmatpush1.msra.mxu0 0.0
  %1819 = vmatprep.subr.mxu0 0.0
  %1820 = vmatpush1.msra.mxu0 0.0
  %1821 = vmatprep.mubr.f32.mxu0 %v1755
  %1822 = vmatmul.mubr.f32.gmra.mrb[0].mxu0 %v1752
  %v1823 = vpop.f32.mrb[0].mxu0
  %v1824 = vadd.f32 0.0, %v1823
  %v1825 = vpop.f32.mrb[0].mxu0
  %1826 = vdwg.mxu0
  %v1827 = vadd.f32 %v1728, %v1824
  %v1828 = vld [vmem:[#allocation2 + $0x10] sm:$0xc0]
  %v1829 = vld [vmem:[#allocation2 + $0x18] sm:$0xc0]
  %s1830 = scalar_lea.vmem %s2, 1008
  %v1831 = vld [vmem:[%s1830] sm:$0xff]
  %v1832 = vld [vmem:[%s1830 + $0x8] sm:$0xff]
  %v1833 = vld [vmem:[%s1830 + $0x10] sm:$0xff]
  %v1834 = vld [vmem:[%s1830 + $0x18] sm:$0xff]
  %v1835 = vld [vmem:[%s1830 + $0x20] sm:$0xff]
  %v1836 = vld [vmem:[%s1830 + $0x28] sm:$0xff]
  %v1837 = vld [vmem:[%s1830 + $0x30] sm:$0xff]
  %v1838 = vld [vmem:[%s1830 + $0x38] sm:$0xff]
  %v1839 = vld [vmem:[%s1830 + $0x40] sm:$0xff]
  %v1840 = vld [vmem:[%s1830 + $0x48] sm:$0xff]
  %v1841 = vld [vmem:[%s1830 + $0x50] sm:$0xff]
  %v1842 = vld [vmem:[%s1830 + $0x58] sm:$0xff]
  %v1843 = vld [vmem:[%s1830 + $0x60] sm:$0xff]
  %v1844 = vld [vmem:[%s1830 + $0x68] sm:$0xff]
  %v1845 = vld [vmem:[%s1830 + $0x70] sm:$0xff]
  %v1846 = vld [vmem:[%s1830 + $0x78] sm:$0xff]
  %v1847 = vld [vmem:[%s1830 + $0x80] sm:$0xff]
  %v1848 = vld [vmem:[%s1830 + $0x88] sm:$0xff]
  %v1851 = vrot.slane %v1828, 6
  %v1852 = vrot.slane %v1829, 6
  %v1854 = vsel %vm1142, %v1852, 0
  %1856 = vmatprep.subr.mxu0 0.0
  %1857 = vmatpush1.msra.mxu0 %v1831
  %1858 = vmatprep.subr.mxu0 0.0
  %1859 = vmatpush1.msra.mxu0 %v1832
  %1860 = vmatprep.subr.mxu0 0.0
  %1861 = vmatpush1.msra.mxu0 %v1833
  %1862 = vmatprep.subr.mxu0 0.0
  %1863 = vmatpush1.msra.mxu0 %v1834
  %1864 = vmatprep.subr.mxu0 0.0
  %1865 = vmatpush1.msra.mxu0 %v1835
  %1866 = vmatprep.subr.mxu0 0.0
  %1867 = vmatpush1.msra.mxu0 %v1836
  %1868 = vmatprep.subr.mxu0 0.0
  %1869 = vmatpush1.msra.mxu0 %v1837
  %1870 = vmatprep.subr.mxu0 0.0
  %1871 = vmatpush1.msra.mxu0 %v1838
  %1872 = vmatprep.subr.mxu0 0.0
  %1873 = vmatpush1.msra.mxu0 %v1839
  %1874 = vmatprep.subr.mxu0 0.0
  %1875 = vmatpush1.msra.mxu0 %v1840
  %1876 = vmatprep.subr.mxu0 0.0
  %1877 = vmatpush1.msra.mxu0 %v1841
  %1878 = vmatprep.subr.mxu0 0.0
  %1879 = vmatpush1.msra.mxu0 %v1842
  %1880 = vmatprep.subr.mxu0 0.0
  %1881 = vmatpush1.msra.mxu0 %v1843
  %1882 = vmatprep.subr.mxu0 0.0
  %1883 = vmatpush1.msra.mxu0 %v1844
  %1884 = vmatprep.subr.mxu0 0.0
  %1885 = vmatpush1.msra.mxu0 %v1845
  %1886 = vmatprep.subr.mxu0 0.0
  %1887 = vmatpush1.msra.mxu0 %v1846
  %1888 = vmatprep.subr.mxu0 0.0
  %1889 = vmatpush1.msra.mxu0 %v1847
  %1890 = vmatprep.subr.mxu0 0.0
  %1891 = vmatpush1.msra.mxu0 %v1848
  %1892 = vmatprep.subr.mxu0 0.0
  %1893 = vmatpush1.msra.mxu0 0.0
  %1894 = vmatprep.subr.mxu0 0.0
  %1895 = vmatpush1.msra.mxu0 0.0
  %1896 = vmatprep.subr.mxu0 0.0
  %1897 = vmatpush1.msra.mxu0 0.0
  %1898 = vmatprep.subr.mxu0 0.0
  %1899 = vmatpush1.msra.mxu0 0.0
  %1900 = vmatprep.subr.mxu0 0.0
  %1901 = vmatpush1.msra.mxu0 0.0
  %1902 = vmatprep.subr.mxu0 0.0
  %1903 = vmatpush1.msra.mxu0 0.0
  %1904 = vmatprep.subr.mxu0 0.0
  %1905 = vmatpush1.msra.mxu0 0.0
  %1906 = vmatprep.subr.mxu0 0.0
  %1907 = vmatpush1.msra.mxu0 0.0
  %1908 = vmatprep.subr.mxu0 0.0
  %1909 = vmatpush1.msra.mxu0 0.0
  %1910 = vmatprep.subr.mxu0 0.0
  %1911 = vmatpush1.msra.mxu0 0.0
  %1912 = vmatprep.subr.mxu0 0.0
  %1913 = vmatpush1.msra.mxu0 0.0
  %1914 = vmatprep.subr.mxu0 0.0
  %1915 = vmatpush1.msra.mxu0 0.0
  %1916 = vmatprep.subr.mxu0 0.0
  %1917 = vmatpush1.msra.mxu0 0.0
  %1918 = vmatprep.subr.mxu0 0.0
  %1919 = vmatpush1.msra.mxu0 0.0
  %1920 = vmatprep.mubr.f32.mxu0 %v1854
  %1921 = vmatmul.mubr.f32.gmra.mrb[0].mxu0 %v1851
  %v1922 = vpop.f32.mrb[0].mxu0
  %v1923 = vadd.f32 0.0, %v1922
  %v1924 = vpop.f32.mrb[0].mxu0
  %1925 = vdwg.mxu0
  %v1926 = vadd.f32 %v1827, %v1923
  %v1927 = vld [vmem:[%s4 + $0x1] sm:$0x1]
  %v1929 = vlaneseq
  %v1930 = vshrl.u32 %v1929, 7
  %v1931 = vsub.s32 0, %v1930
  %v1932 = vrot.slane %v1927, %v1931
  %1933 = vrot.lane.b32.xlu0 %v1932, 112
  %v1934 = vpop.permute.xlu0 %1933
  %v1936 = vadd.f32 %v1926, %v1934
  %v1937 = vmax.f32 %v1936, 0.0
  %v1938 = vld [vmem:[%s3] sm:$0xff]
  %v1939 = vld [vmem:[%s3 + $0x8] sm:$0xff]
  %v1940 = vld [vmem:[%s3 + $0x10] sm:$0xff]
  %v1941 = vld [vmem:[%s3 + $0x18] sm:$0xff]
  %1942 = vrot.lane.b32.xlu0 %v1932, 80
  %v1943 = vpop.permute.xlu0 %1942
  %vm1945 = vcmask 261120
  %v1947 = vsel %vm1945, %v1937, 0
  %1949 = vmatprep.subr.mxu0 0.0
  %1950 = vmatpush1.msra.mxu0 %v1938
  %1951 = vmatprep.subr.mxu0 0.0
  %1952 = vmatpush1.msra.mxu0 %v1939
  %1953 = vmatprep.subr.mxu0 0.0
  %1954 = vmatpush1.msra.mxu0 %v1940
  %1955 = vmatprep.subr.mxu0 0.0
  %1956 = vmatpush1.msra.mxu0 %v1941
  %1957 = vmatprep.subr.mxu0 0.0
  %1958 = vmatpush1.msra.mxu0 0.0
  %1959 = vmatprep.subr.mxu0 0.0
  %1960 = vmatpush1.msra.mxu0 0.0
  %1961 = vmatprep.subr.mxu0 0.0
  %1962 = vmatpush1.msra.mxu0 0.0
  %1963 = vmatprep.subr.mxu0 0.0
  %1964 = vmatpush1.msra.mxu0 0.0
  %1965 = vmatprep.subr.mxu0 0.0
  %1966 = vmatpush1.msra.mxu0 0.0
  %1967 = vmatprep.subr.mxu0 0.0
  %1968 = vmatpush1.msra.mxu0 0.0
  %1969 = vmatprep.subr.mxu0 0.0
  %1970 = vmatpush1.msra.mxu0 0.0
  %1971 = vmatprep.subr.mxu0 0.0
  %1972 = vmatpush1.msra.mxu0 0.0
  %1973 = vmatprep.subr.mxu0 0.0
  %1974 = vmatpush1.msra.mxu0 0.0
  %1975 = vmatprep.subr.mxu0 0.0
  %1976 = vmatpush1.msra.mxu0 0.0
  %1977 = vmatprep.subr.mxu0 0.0
  %1978 = vmatpush1.msra.mxu0 0.0
  %1979 = vmatprep.subr.mxu0 0.0
  %1980 = vmatpush1.msra.mxu0 0.0
  %1981 = vmatprep.subr.mxu0 0.0
  %1982 = vmatpush1.msra.mxu0 0.0
  %1983 = vmatprep.subr.mxu0 0.0
  %1984 = vmatpush1.msra.mxu0 0.0
  %1985 = vmatprep.subr.mxu0 0.0
  %1986 = vmatpush1.msra.mxu0 0.0
  %1987 = vmatprep.subr.mxu0 0.0
  %1988 = vmatpush1.msra.mxu0 0.0
  %1989 = vmatprep.subr.mxu0 0.0
  %1990 = vmatpush1.msra.mxu0 0.0
  %1991 = vmatprep.subr.mxu0 0.0
  %1992 = vmatpush1.msra.mxu0 0.0
  %1993 = vmatprep.subr.mxu0 0.0
  %1994 = vmatpush1.msra.mxu0 0.0
  %1995 = vmatprep.subr.mxu0 0.0
  %1996 = vmatpush1.msra.mxu0 0.0
  %1997 = vmatprep.subr.mxu0 0.0
  %1998 = vmatpush1.msra.mxu0 0.0
  %1999 = vmatprep.subr.mxu0 0.0
  %2000 = vmatpush1.msra.mxu0 0.0
  %2001 = vmatprep.subr.mxu0 0.0
  %2002 = vmatpush1.msra.mxu0 0.0
  %2003 = vmatprep.subr.mxu0 0.0
  %2004 = vmatpush1.msra.mxu0 0.0
  %2005 = vmatprep.subr.mxu0 0.0
  %2006 = vmatpush1.msra.mxu0 0.0
  %2007 = vmatprep.subr.mxu0 0.0
  %2008 = vmatpush1.msra.mxu0 0.0
  %2009 = vmatprep.subr.mxu0 0.0
  %2010 = vmatpush1.msra.mxu0 0.0
  %2011 = vmatprep.subr.mxu0 0.0
  %2012 = vmatpush1.msra.mxu0 0.0
  %2013 = vmatprep.mubr.f32.mxu0 0.0
  %2014 = vmatmul.mubr.f32.gmra.mrb[0].mxu0 %v1947
  %v2015 = vpop.f32.mrb[0].mxu0
  %v2016 = vadd.f32 %v1943, %v2015
  %v2017 = vpop.f32.mrb[0].mxu0
  %2018 = vdwg.mxu0
  %v2019 = vmax.f32 %v2016, 0.0
  %2024 = vrot.lane.b32.xlu0 %v1938, 96
  %v2025 = vpop.permute.xlu0 %2024
  %2026 = vrot.lane.b32.xlu0 %v1939, 96
  %v2027 = vpop.permute.xlu0 %2026
  %2028 = vrot.lane.b32.xlu0 %v1940, 96
  %v2029 = vpop.permute.xlu0 %2028
  %2030 = vrot.lane.b32.xlu0 %v1941, 96
  %v2031 = vpop.permute.xlu0 %2030
  %2036 = vrot.lane.b32.xlu0 %v1932, 48
  %v2037 = vpop.permute.xlu0 %2036
  %v2040 = vsel %vm1945, %v2019, 0
  %2042 = vmatprep.subr.mxu0 0.0
  %2043 = vmatpush1.msra.mxu0 %v2025
  %2044 = vmatprep.subr.mxu0 0.0
  %2045 = vmatpush1.msra.mxu0 %v2027
  %2046 = vmatprep.subr.mxu0 0.0
  %2047 = vmatpush1.msra.mxu0 %v2029
  %2048 = vmatprep.subr.mxu0 0.0
  %2049 = vmatpush1.msra.mxu0 %v2031
  %2050 = vmatprep.subr.mxu0 0.0
  %2051 = vmatpush1.msra.mxu0 0.0
  %2052 = vmatprep.subr.mxu0 0.0
  %2053 = vmatpush1.msra.mxu0 0.0
  %2054 = vmatprep.subr.mxu0 0.0
  %2055 = vmatpush1.msra.mxu0 0.0
  %2056 = vmatprep.subr.mxu0 0.0
  %2057 = vmatpush1.msra.mxu0 0.0
  %2058 = vmatprep.subr.mxu0 0.0
  %2059 = vmatpush1.msra.mxu0 0.0
  %2060 = vmatprep.subr.mxu0 0.0
  %2061 = vmatpush1.msra.mxu0 0.0
  %2062 = vmatprep.subr.mxu0 0.0
  %2063 = vmatpush1.msra.mxu0 0.0
  %2064 = vmatprep.subr.mxu0 0.0
  %2065 = vmatpush1.msra.mxu0 0.0
  %2066 = vmatprep.subr.mxu0 0.0
  %2067 = vmatpush1.msra.mxu0 0.0
  %2068 = vmatprep.subr.mxu0 0.0
  %2069 = vmatpush1.msra.mxu0 0.0
  %2070 = vmatprep.subr.mxu0 0.0
  %2071 = vmatpush1.msra.mxu0 0.0
  %2072 = vmatprep.subr.mxu0 0.0
  %2073 = vmatpush1.msra.mxu0 0.0
  %2074 = vmatprep.subr.mxu0 0.0
  %2075 = vmatpush1.msra.mxu0 0.0
  %2076 = vmatprep.subr.mxu0 0.0
  %2077 = vmatpush1.msra.mxu0 0.0
  %2078 = vmatprep.subr.mxu0 0.0
  %2079 = vmatpush1.msra.mxu0 0.0
  %2080 = vmatprep.subr.mxu0 0.0
  %2081 = vmatpush1.msra.mxu0 0.0
  %2082 = vmatprep.subr.mxu0 0.0
  %2083 = vmatpush1.msra.mxu0 0.0
  %2084 = vmatprep.subr.mxu0 0.0
  %2085 = vmatpush1.msra.mxu0 0.0
  %2086 = vmatprep.subr.mxu0 0.0
  %2087 = vmatpush1.msra.mxu0 0.0
  %2088 = vmatprep.subr.mxu0 0.0
  %2089 = vmatpush1.msra.mxu0 0.0
  %2090 = vmatprep.subr.mxu0 0.0
  %2091 = vmatpush1.msra.mxu0 0.0
  %2092 = vmatprep.subr.mxu0 0.0
  %2093 = vmatpush1.msra.mxu0 0.0
  %2094 = vmatprep.subr.mxu0 0.0
  %2095 = vmatpush1.msra.mxu0 0.0
  %2096 = vmatprep.subr.mxu0 0.0
  %2097 = vmatpush1.msra.mxu0 0.0
  %2098 = vmatprep.subr.mxu0 0.0
  %2099 = vmatpush1.msra.mxu0 0.0
  %2100 = vmatprep.subr.mxu0 0.0
  %2101 = vmatpush1.msra.mxu0 0.0
  %2102 = vmatprep.subr.mxu0 0.0
  %2103 = vmatpush1.msra.mxu0 0.0
  %2104 = vmatprep.subr.mxu0 0.0
  %2105 = vmatpush1.msra.mxu0 0.0
  %2106 = vmatprep.mubr.f32.mxu0 0.0
  %2107 = vmatmul.mubr.f32.gmra.mrb[0].mxu0 %v2040
  %v2108 = vpop.f32.mrb[0].mxu0
  %v2109 = vadd.f32 %v2037, %v2108
  %v2110 = vpop.f32.mrb[0].mxu0
  %2111 = vdwg.mxu0
  %v2112 = vmax.f32 %v2109, -20.0
  %v2113 = vmin.f32 %v2112, 2.0
  %v2114 = vmul.f32 %v2113, 1.442695
  %v2115 = vpow.pop %v2114
  %v2116 = vld [vmem:[%s5] sm:$0x3]
  %2118 = vrot.lane.b32.xlu0 %v2116, 4
  %v2119 = vpop.permute.xlu0 %2118
  %v2121 = vmul.f32 %v2115, %v2119
  %2123 = vrot.lane.b32.xlu0 %v2121, 124
  %v2124 = vpop.permute.xlu0 %2123
  %v2126 = vadd.f32 %v2109, %v2124
  %v2127 = vmul.f32 %v2116, -0.5
  %v2128 = vmul.f32 %v2127, %v2116
  %2130 = vrot.lane.b32.xlu0 %v2113, 124
  %v2131 = vpop.permute.xlu0 %2130
  %v2133 = vsub.f32 %v2128, %v2131
  %vm2134 = vcmask 25600
  %v2135 = vsel %vm2134, %v2133, 0.0
  %2136 = vadd.xlane.f32.xlu0 %v2135
  %v2137 = vpop.xlane.xlu0 %2136
  %v2138 = vsub.f32 %v2137, 3.675754
  %v2139 = vtanh.pop %v2126
  %v2140 = vtanh.pop %v2109
  %2142 = vrot.lane.b32.xlu0 %v2140, 4
  %v2143 = vpop.permute.xlu0 %2142
  %vm2145 = vcmask 31744
  %v2146 = vsel %vm2145, %v2139, %v2143
  %vm2147 = vcmask 64512
  %v2148 = vsel %vm2147, %v2146, %v2138
  %vm2149 = vcmask 72704
  %v2150 = vsel %vm2149, %v2148, 0.0
  %vm2151 = vcmask 123904
  %2152 = vst.msk [vmem:[%s6] sm:$0x3] %vm2151, %v2150
  // Predicated region
  $region26: #{actor_forward.1} parent=0 // pred_check
    _
  $region27: #{actor_forward.1} parent=0 // pred_check_branch
    %2154 = sbr.rel (0) target = $region29
  $region28: #{actor_forward.1} parent=0 // pred_region
    _
  $region29: #{actor_forward.1} parent=0 // pred_fallthru
    _
  // Predicated region
  $region30: #{actor_forward.1} parent=0 // pred_check
    _
  $region31: #{actor_forward.1} parent=0 // pred_check_branch
    %2156 = sbr.rel (0) target = $region33
  $region32: #{actor_forward.1} parent=0 // pred_region
    _
  $region33: #{actor_forward.1} parent=0 // pred_fallthru
    _

</llo_original>
